<compile_context>
chip_gen: v7x
topology: tpu7x:2x2x1
jax: 0.10.0
libtpu: 0.0.40
codegen_flags: <defaults>
</compile_context>

<pallas_src>
import numpy as np

import jax
import jax.numpy as jnp
from jax.experimental import pallas as pl
from jax.experimental.pallas import tpu as pltpu


def fixed_sincos1d_embeddings(max_len: int, dim: int) -> jnp.ndarray:
    """Same construction as the PyTorch helper (numpy, then to device)."""
    freqs = 1.0 / 10000.0 ** np.linspace(0, 1, dim // 2)
    pos = np.arange(0, max_len, dtype=np.float32)[:, None]
    pos_enc = np.dot(pos, freqs[None, :])
    emb = np.concatenate([np.sin(pos_enc), np.cos(pos_enc)], axis=1)
    return jnp.asarray(emb, dtype=jnp.float32)


def _make_kernel(batch_tile: int, seq: int):
    def kernel(ids_ref,          # SMEM (B, S) int32   -- scalar prefetch
               wte_hbm,          # HBM  (V, D)         -- raw ref, manual DMA
               pos_ref,          # VMEM (S, D)         -- constant block
               o_ref,            # VMEM (batch_tile, S, D) output block
               sem):             # DMA sems (batch_tile, S)
        g = pl.program_id(0)

        # Gather the embedding rows for this slab directly into the output
        # block.  Issue every DMA before waiting on any so they all overlap
        # (and overlap the previous step's output writeback).
        copies = []
        for b in range(batch_tile):          # static unroll (small, static)
            for s in range(seq):
                tok = ids_ref[g * batch_tile + b, s]
                cp = pltpu.make_async_copy(
                    wte_hbm.at[pl.ds(tok, 1), :],
                    o_ref.at[b, pl.ds(s, 1), :],
                    sem.at[b, s])
                cp.start()
                copies.append(cp)
        for cp in copies:
            cp.wait()

        # Lane-dense in-place VPU add: (batch_tile, S, D) += (S, D) broadcast.
        o_ref[...] = o_ref[...] + pos_ref[...]

    return kernel


def text_embed(token_ids, wte, pos_emb, truncation_len: int, *, batch_tile=None):
    """Pallas equivalent of TextEmbed.forward."""
    B, S = token_ids.shape
    assert S == truncation_len, (
        f"Truncation length mismatch: {truncation_len} != {S}")
    V, D = wte.shape

    if batch_tile is None:
        batch_tile = 2 if B % 2 == 0 else 1   # keep grid extent >= 2 when possible
    assert B % batch_tile == 0

    pos = pos_emb[:S, :]
    kernel = _make_kernel(batch_tile, S)

    grid_spec = pltpu.PrefetchScalarGridSpec(
        num_scalar_prefetch=1,                 # token ids -> SMEM
        grid=(B // batch_tile,),
        in_specs=[
            pl.BlockSpec(memory_space=pl.ANY),               # wte stays in HBM
            pl.BlockSpec((S, D), lambda g, ids: (0, 0)),     # pos slab (constant)
        ],
        out_specs=pl.BlockSpec((batch_tile, S, D), lambda g, ids: (g, 0, 0)),
        scratch_shapes=[
            pltpu.SemaphoreType.DMA((batch_tile, S)),
        ],
    )

    fn = pl.pallas_call(
        kernel,
        out_shape=jax.ShapeDtypeStruct((B, S, D), jnp.float32),
        grid_spec=grid_spec,
        compiler_params=pltpu.CompilerParams(
            dimension_semantics=("parallel",)),
    )
    return fn(token_ids.astype(jnp.int32), wte, pos)


def text_embed_reference(token_ids, wte, pos_emb):
    """Pure-JAX reference mirroring the PyTorch module."""
    S = token_ids.shape[1]
    return jnp.take(wte, token_ids, axis=0) + pos_emb[:S, :][None, :, :]


if __name__ == "__main__":
    # Small ViTConfig-like setup: dim=128 (multiple of 128 -> lane-dense),
    # truncation_len=8, batch=4, vocab=1000, max_len=16.
    B, S, D = 4, 8, 128
    VOCAB, MAX_LEN = 1000, 16

    key = jax.random.PRNGKey(0)
    kid, kw = jax.random.split(key)
    token_ids = jax.random.randint(kid, (B, S), 0, VOCAB, dtype=jnp.int32)
    wte = 0.02 * jax.random.normal(kw, (VOCAB, D), jnp.float32)
    pos_emb = fixed_sincos1d_embeddings(MAX_LEN, D)

    out = text_embed(token_ids, wte, pos_emb, truncation_len=S)
    out = jax.block_until_ready(out)

    ref = text_embed_reference(token_ids, wte, pos_emb)
    assert out.shape == (B, S, D)
    assert jnp.allclose(out, ref, atol=1e-6, rtol=1e-6), (
        float(jnp.max(jnp.abs(out - ref))))

    print("KERNEL_OK")
</pallas_src>

<mosaic_0001>
module attributes {stable_mosaic.version = 11 : i64} {
  func.func @kernel(%arg0: i32, %arg1: memref<4x8xi32, #tpu.memory_space<smem>>, %arg2: memref<1000x128xf32, #tpu.memory_space<any>>, %arg3: memref<8x128xf32, #tpu.memory_space<vmem>>, %arg4: memref<2x8x128xf32, #tpu.memory_space<vmem>>, %arg5: memref<2x8x!tpu.dma_semaphore, #tpu.memory_space<semaphore_mem>>) attributes {dimension_semantics = [#tpu.dimension_semantics<parallel>], iteration_bounds = array<i64: 2>, scalar_prefetch = 1 : i64, scratch_operands = 1 : i64, tpu.core_type = #tpu.core_type<tc>, window_params = [{}, {pipeline_mode = #tpu.pipeline_mode<synchronous>, transform_indices = @transform_1, window_bounds = array<i64: 8, 128>}, {transform_indices = @transform_2, window_bounds = array<i64: 2, 8, 128>}]} {
    %c2_i32 = arith.constant 2 : i32
    %0 = arith.muli %arg0, %c2_i32 : i32
    %c0_i32 = arith.constant 0 : i32
    %1 = arith.addi %0, %c0_i32 : i32
    %2 = arith.index_cast %1 : i32 to index
    %c0 = arith.constant 0 : index
    %3 = memref.load %arg1[%2, %c0] : memref<4x8xi32, #tpu.memory_space<smem>>
    %c0_i32_0 = arith.constant 0 : i32
    %c0_i32_1 = arith.constant 0 : i32
    %c0_i32_2 = arith.constant 0 : i32
    %c0_i32_3 = arith.constant 0 : i32
    %4 = tpu.memref_slice %arg2[%3, %c0_i32_3] : memref<1000x128xf32, #tpu.memory_space<any>> -> memref<1x128xf32, #tpu.memory_space<any>>
    %c0_i32_4 = arith.constant 0 : i32
    %c0_i32_5 = arith.constant 0 : i32
    %5 = tpu.memref_slice %arg4[%c0_i32_0, %c0_i32_4, %c0_i32_5] : memref<2x8x128xf32, #tpu.memory_space<vmem>> -> memref<1x1x128xf32, #tpu.memory_space<vmem>>
    %6 = tpu.memref_squeeze %5 : memref<1x1x128xf32, #tpu.memory_space<vmem>> -> memref<1x128xf32, #tpu.memory_space<vmem>>
    %7 = tpu.memref_slice %arg5[%c0_i32_1, %c0_i32_2] : memref<2x8x!tpu.dma_semaphore, #tpu.memory_space<semaphore_mem>> -> memref<1x1x!tpu.dma_semaphore, #tpu.memory_space<semaphore_mem>>
    %8 = tpu.memref_squeeze %7 : memref<1x1x!tpu.dma_semaphore, #tpu.memory_space<semaphore_mem>> -> memref<!tpu.dma_semaphore, #tpu.memory_space<semaphore_mem>>
    tpu.enqueue_dma source(%4 : memref<1x128xf32, #tpu.memory_space<any>>) target(%6 : memref<1x128xf32, #tpu.memory_space<vmem>>) target_semaphore(%8 : memref<!tpu.dma_semaphore, #tpu.memory_space<semaphore_mem>>)
    %c2_i32_6 = arith.constant 2 : i32
    %9 = arith.muli %arg0, %c2_i32_6 : i32
    %c0_i32_7 = arith.constant 0 : i32
    %10 = arith.addi %9, %c0_i32_7 : i32
    %11 = arith.index_cast %10 : i32 to index
    %c1 = arith.constant 1 : index
    %12 = memref.load %arg1[%11, %c1] : memref<4x8xi32, #tpu.memory_space<smem>>
    %c0_i32_8 = arith.constant 0 : i32
    %c0_i32_9 = arith.constant 0 : i32
    %c1_i32 = arith.constant 1 : i32
    %c0_i32_10 = arith.constant 0 : i32
    %13 = tpu.memref_slice %arg2[%12, %c0_i32_10] : memref<1000x128xf32, #tpu.memory_space<any>> -> memref<1x128xf32, #tpu.memory_space<any>>
    %c1_i32_11 = arith.constant 1 : i32
    %c0_i32_12 = arith.constant 0 : i32
    %14 = tpu.memref_slice %arg4[%c0_i32_8, %c1_i32_11, %c0_i32_12] : memref<2x8x128xf32, #tpu.memory_space<vmem>> -> memref<1x1x128xf32, #tpu.memory_space<vmem>>
    %15 = tpu.memref_squeeze %14 : memref<1x1x128xf32, #tpu.memory_space<vmem>> -> memref<1x128xf32, #tpu.memory_space<vmem>>
    %16 = tpu.memref_slice %arg5[%c0_i32_9, %c1_i32] : memref<2x8x!tpu.dma_semaphore, #tpu.memory_space<semaphore_mem>> -> memref<1x1x!tpu.dma_semaphore, #tpu.memory_space<semaphore_mem>>
    %17 = tpu.memref_squeeze %16 : memref<1x1x!tpu.dma_semaphore, #tpu.memory_space<semaphore_mem>> -> memref<!tpu.dma_semaphore, #tpu.memory_space<semaphore_mem>>
    tpu.enqueue_dma source(%13 : memref<1x128xf32, #tpu.memory_space<any>>) target(%15 : memref<1x128xf32, #tpu.memory_space<vmem>>) target_semaphore(%17 : memref<!tpu.dma_semaphore, #tpu.memory_space<semaphore_mem>>)
    %c2_i32_13 = arith.constant 2 : i32
    %18 = arith.muli %arg0, %c2_i32_13 : i32
    %c0_i32_14 = arith.constant 0 : i32
    %19 = arith.addi %18, %c0_i32_14 : i32
    %20 = arith.index_cast %19 : i32 to index
    %c2 = arith.constant 2 : index
    %21 = memref.load %arg1[%20, %c2] : memref<4x8xi32, #tpu.memory_space<smem>>
    %c0_i32_15 = arith.constant 0 : i32
    %c0_i32_16 = arith.constant 0 : i32
    %c2_i32_17 = arith.constant 2 : i32
    %c0_i32_18 = arith.constant 0 : i32
    %22 = tpu.memref_slice %arg2[%21, %c0_i32_18] : memref<1000x128xf32, #tpu.memory_space<any>> -> memref<1x128xf32, #tpu.memory_space<any>>
    %c2_i32_19 = arith.constant 2 : i32
    %c0_i32_20 = arith.constant 0 : i32
    %23 = tpu.memref_slice %arg4[%c0_i32_15, %c2_i32_19, %c0_i32_20] : memref<2x8x128xf32, #tpu.memory_space<vmem>> -> memref<1x1x128xf32, #tpu.memory_space<vmem>>
    %24 = tpu.memref_squeeze %23 : memref<1x1x128xf32, #tpu.memory_space<vmem>> -> memref<1x128xf32, #tpu.memory_space<vmem>>
    %25 = tpu.memref_slice %arg5[%c0_i32_16, %c2_i32_17] : memref<2x8x!tpu.dma_semaphore, #tpu.memory_space<semaphore_mem>> -> memref<1x1x!tpu.dma_semaphore, #tpu.memory_space<semaphore_mem>>
    %26 = tpu.memref_squeeze %25 : memref<1x1x!tpu.dma_semaphore, #tpu.memory_space<semaphore_mem>> -> memref<!tpu.dma_semaphore, #tpu.memory_space<semaphore_mem>>
    tpu.enqueue_dma source(%22 : memref<1x128xf32, #tpu.memory_space<any>>) target(%24 : memref<1x128xf32, #tpu.memory_space<vmem>>) target_semaphore(%26 : memref<!tpu.dma_semaphore, #tpu.memory_space<semaphore_mem>>)
    %c2_i32_21 = arith.constant 2 : i32
    %27 = arith.muli %arg0, %c2_i32_21 : i32
    %c0_i32_22 = arith.constant 0 : i32
    %28 = arith.addi %27, %c0_i32_22 : i32
    %29 = arith.index_cast %28 : i32 to index
    %c3 = arith.constant 3 : index
    %30 = memref.load %arg1[%29, %c3] : memref<4x8xi32, #tpu.memory_space<smem>>
    %c0_i32_23 = arith.constant 0 : i32
    %c0_i32_24 = arith.constant 0 : i32
    %c3_i32 = arith.constant 3 : i32
    %c0_i32_25 = arith.constant 0 : i32
    %31 = tpu.memref_slice %arg2[%30, %c0_i32_25] : memref<1000x128xf32, #tpu.memory_space<any>> -> memref<1x128xf32, #tpu.memory_space<any>>
    %c3_i32_26 = arith.constant 3 : i32
    %c0_i32_27 = arith.constant 0 : i32
    %32 = tpu.memref_slice %arg4[%c0_i32_23, %c3_i32_26, %c0_i32_27] : memref<2x8x128xf32, #tpu.memory_space<vmem>> -> memref<1x1x128xf32, #tpu.memory_space<vmem>>
    %33 = tpu.memref_squeeze %32 : memref<1x1x128xf32, #tpu.memory_space<vmem>> -> memref<1x128xf32, #tpu.memory_space<vmem>>
    %34 = tpu.memref_slice %arg5[%c0_i32_24, %c3_i32] : memref<2x8x!tpu.dma_semaphore, #tpu.memory_space<semaphore_mem>> -> memref<1x1x!tpu.dma_semaphore, #tpu.memory_space<semaphore_mem>>
    %35 = tpu.memref_squeeze %34 : memref<1x1x!tpu.dma_semaphore, #tpu.memory_space<semaphore_mem>> -> memref<!tpu.dma_semaphore, #tpu.memory_space<semaphore_mem>>
    tpu.enqueue_dma source(%31 : memref<1x128xf32, #tpu.memory_space<any>>) target(%33 : memref<1x128xf32, #tpu.memory_space<vmem>>) target_semaphore(%35 : memref<!tpu.dma_semaphore, #tpu.memory_space<semaphore_mem>>)
    %c2_i32_28 = arith.constant 2 : i32
    %36 = arith.muli %arg0, %c2_i32_28 : i32
    %c0_i32_29 = arith.constant 0 : i32
    %37 = arith.addi %36, %c0_i32_29 : i32
    %38 = arith.index_cast %37 : i32 to index
    %c4 = arith.constant 4 : index
    %39 = memref.load %arg1[%38, %c4] : memref<4x8xi32, #tpu.memory_space<smem>>
    %c0_i32_30 = arith.constant 0 : i32
    %c0_i32_31 = arith.constant 0 : i32
    %c4_i32 = arith.constant 4 : i32
    %c0_i32_32 = arith.constant 0 : i32
    %40 = tpu.memref_slice %arg2[%39, %c0_i32_32] : memref<1000x128xf32, #tpu.memory_space<any>> -> memref<1x128xf32, #tpu.memory_space<any>>
    %c4_i32_33 = arith.constant 4 : i32
    %c0_i32_34 = arith.constant 0 : i32
    %41 = tpu.memref_slice %arg4[%c0_i32_30, %c4_i32_33, %c0_i32_34] : memref<2x8x128xf32, #tpu.memory_space<vmem>> -> memref<1x1x128xf32, #tpu.memory_space<vmem>>
    %42 = tpu.memref_squeeze %41 : memref<1x1x128xf32, #tpu.memory_space<vmem>> -> memref<1x128xf32, #tpu.memory_space<vmem>>
    %43 = tpu.memref_slice %arg5[%c0_i32_31, %c4_i32] : memref<2x8x!tpu.dma_semaphore, #tpu.memory_space<semaphore_mem>> -> memref<1x1x!tpu.dma_semaphore, #tpu.memory_space<semaphore_mem>>
    %44 = tpu.memref_squeeze %43 : memref<1x1x!tpu.dma_semaphore, #tpu.memory_space<semaphore_mem>> -> memref<!tpu.dma_semaphore, #tpu.memory_space<semaphore_mem>>
    tpu.enqueue_dma source(%40 : memref<1x128xf32, #tpu.memory_space<any>>) target(%42 : memref<1x128xf32, #tpu.memory_space<vmem>>) target_semaphore(%44 : memref<!tpu.dma_semaphore, #tpu.memory_space<semaphore_mem>>)
    %c2_i32_35 = arith.constant 2 : i32
    %45 = arith.muli %arg0, %c2_i32_35 : i32
    %c0_i32_36 = arith.constant 0 : i32
    %46 = arith.addi %45, %c0_i32_36 : i32
    %47 = arith.index_cast %46 : i32 to index
    %c5 = arith.constant 5 : index
    %48 = memref.load %arg1[%47, %c5] : memref<4x8xi32, #tpu.memory_space<smem>>
    %c0_i32_37 = arith.constant 0 : i32
    %c0_i32_38 = arith.constant 0 : i32
    %c5_i32 = arith.constant 5 : i32
    %c0_i32_39 = arith.constant 0 : i32
    %49 = tpu.memref_slice %arg2[%48, %c0_i32_39] : memref<1000x128xf32, #tpu.memory_space<any>> -> memref<1x128xf32, #tpu.memory_space<any>>
    %c5_i32_40 = arith.constant 5 : i32
    %c0_i32_41 = arith.constant 0 : i32
    %50 = tpu.memref_slice %arg4[%c0_i32_37, %c5_i32_40, %c0_i32_41] : memref<2x8x128xf32, #tpu.memory_space<vmem>> -> memref<1x1x128xf32, #tpu.memory_space<vmem>>
    %51 = tpu.memref_squeeze %50 : memref<1x1x128xf32, #tpu.memory_space<vmem>> -> memref<1x128xf32, #tpu.memory_space<vmem>>
    %52 = tpu.memref_slice %arg5[%c0_i32_38, %c5_i32] : memref<2x8x!tpu.dma_semaphore, #tpu.memory_space<semaphore_mem>> -> memref<1x1x!tpu.dma_semaphore, #tpu.memory_space<semaphore_mem>>
    %53 = tpu.memref_squeeze %52 : memref<1x1x!tpu.dma_semaphore, #tpu.memory_space<semaphore_mem>> -> memref<!tpu.dma_semaphore, #tpu.memory_space<semaphore_mem>>
    tpu.enqueue_dma source(%49 : memref<1x128xf32, #tpu.memory_space<any>>) target(%51 : memref<1x128xf32, #tpu.memory_space<vmem>>) target_semaphore(%53 : memref<!tpu.dma_semaphore, #tpu.memory_space<semaphore_mem>>)
    %c2_i32_42 = arith.constant 2 : i32
    %54 = arith.muli %arg0, %c2_i32_42 : i32
    %c0_i32_43 = arith.constant 0 : i32
    %55 = arith.addi %54, %c0_i32_43 : i32
    %56 = arith.index_cast %55 : i32 to index
    %c6 = arith.constant 6 : index
    %57 = memref.load %arg1[%56, %c6] : memref<4x8xi32, #tpu.memory_space<smem>>
    %c0_i32_44 = arith.constant 0 : i32
    %c0_i32_45 = arith.constant 0 : i32
    %c6_i32 = arith.constant 6 : i32
    %c0_i32_46 = arith.constant 0 : i32
    %58 = tpu.memref_slice %arg2[%57, %c0_i32_46] : memref<1000x128xf32, #tpu.memory_space<any>> -> memref<1x128xf32, #tpu.memory_space<any>>
    %c6_i32_47 = arith.constant 6 : i32
    %c0_i32_48 = arith.constant 0 : i32
    %59 = tpu.memref_slice %arg4[%c0_i32_44, %c6_i32_47, %c0_i32_48] : memref<2x8x128xf32, #tpu.memory_space<vmem>> -> memref<1x1x128xf32, #tpu.memory_space<vmem>>
    %60 = tpu.memref_squeeze %59 : memref<1x1x128xf32, #tpu.memory_space<vmem>> -> memref<1x128xf32, #tpu.memory_space<vmem>>
    %61 = tpu.memref_slice %arg5[%c0_i32_45, %c6_i32] : memref<2x8x!tpu.dma_semaphore, #tpu.memory_space<semaphore_mem>> -> memref<1x1x!tpu.dma_semaphore, #tpu.memory_space<semaphore_mem>>
    %62 = tpu.memref_squeeze %61 : memref<1x1x!tpu.dma_semaphore, #tpu.memory_space<semaphore_mem>> -> memref<!tpu.dma_semaphore, #tpu.memory_space<semaphore_mem>>
    tpu.enqueue_dma source(%58 : memref<1x128xf32, #tpu.memory_space<any>>) target(%60 : memref<1x128xf32, #tpu.memory_space<vmem>>) target_semaphore(%62 : memref<!tpu.dma_semaphore, #tpu.memory_space<semaphore_mem>>)
    %c2_i32_49 = arith.constant 2 : i32
    %63 = arith.muli %arg0, %c2_i32_49 : i32
    %c0_i32_50 = arith.constant 0 : i32
    %64 = arith.addi %63, %c0_i32_50 : i32
    %65 = arith.index_cast %64 : i32 to index
    %c7 = arith.constant 7 : index
    %66 = memref.load %arg1[%65, %c7] : memref<4x8xi32, #tpu.memory_space<smem>>
    %c0_i32_51 = arith.constant 0 : i32
    %c0_i32_52 = arith.constant 0 : i32
    %c7_i32 = arith.constant 7 : i32
    %c0_i32_53 = arith.constant 0 : i32
    %67 = tpu.memref_slice %arg2[%66, %c0_i32_53] : memref<1000x128xf32, #tpu.memory_space<any>> -> memref<1x128xf32, #tpu.memory_space<any>>
    %c7_i32_54 = arith.constant 7 : i32
    %c0_i32_55 = arith.constant 0 : i32
    %68 = tpu.memref_slice %arg4[%c0_i32_51, %c7_i32_54, %c0_i32_55] : memref<2x8x128xf32, #tpu.memory_space<vmem>> -> memref<1x1x128xf32, #tpu.memory_space<vmem>>
    %69 = tpu.memref_squeeze %68 : memref<1x1x128xf32, #tpu.memory_space<vmem>> -> memref<1x128xf32, #tpu.memory_space<vmem>>
    %70 = tpu.memref_slice %arg5[%c0_i32_52, %c7_i32] : memref<2x8x!tpu.dma_semaphore, #tpu.memory_space<semaphore_mem>> -> memref<1x1x!tpu.dma_semaphore, #tpu.memory_space<semaphore_mem>>
    %71 = tpu.memref_squeeze %70 : memref<1x1x!tpu.dma_semaphore, #tpu.memory_space<semaphore_mem>> -> memref<!tpu.dma_semaphore, #tpu.memory_space<semaphore_mem>>
    tpu.enqueue_dma source(%67 : memref<1x128xf32, #tpu.memory_space<any>>) target(%69 : memref<1x128xf32, #tpu.memory_space<vmem>>) target_semaphore(%71 : memref<!tpu.dma_semaphore, #tpu.memory_space<semaphore_mem>>)
    %c2_i32_56 = arith.constant 2 : i32
    %72 = arith.muli %arg0, %c2_i32_56 : i32
    %c1_i32_57 = arith.constant 1 : i32
    %73 = arith.addi %72, %c1_i32_57 : i32
    %74 = arith.index_cast %73 : i32 to index
    %c0_58 = arith.constant 0 : index
    %75 = memref.load %arg1[%74, %c0_58] : memref<4x8xi32, #tpu.memory_space<smem>>
    %c1_i32_59 = arith.constant 1 : i32
    %c1_i32_60 = arith.constant 1 : i32
    %c0_i32_61 = arith.constant 0 : i32
    %c0_i32_62 = arith.constant 0 : i32
    %76 = tpu.memref_slice %arg2[%75, %c0_i32_62] : memref<1000x128xf32, #tpu.memory_space<any>> -> memref<1x128xf32, #tpu.memory_space<any>>
    %c0_i32_63 = arith.constant 0 : i32
    %c0_i32_64 = arith.constant 0 : i32
    %77 = tpu.memref_slice %arg4[%c1_i32_59, %c0_i32_63, %c0_i32_64] : memref<2x8x128xf32, #tpu.memory_space<vmem>> -> memref<1x1x128xf32, #tpu.memory_space<vmem>>
    %78 = tpu.memref_squeeze %77 : memref<1x1x128xf32, #tpu.memory_space<vmem>> -> memref<1x128xf32, #tpu.memory_space<vmem>>
    %79 = tpu.memref_slice %arg5[%c1_i32_60, %c0_i32_61] : memref<2x8x!tpu.dma_semaphore, #tpu.memory_space<semaphore_mem>> -> memref<1x1x!tpu.dma_semaphore, #tpu.memory_space<semaphore_mem>>
    %80 = tpu.memref_squeeze %79 : memref<1x1x!tpu.dma_semaphore, #tpu.memory_space<semaphore_mem>> -> memref<!tpu.dma_semaphore, #tpu.memory_space<semaphore_mem>>
    tpu.enqueue_dma source(%76 : memref<1x128xf32, #tpu.memory_space<any>>) target(%78 : memref<1x128xf32, #tpu.memory_space<vmem>>) target_semaphore(%80 : memref<!tpu.dma_semaphore, #tpu.memory_space<semaphore_mem>>)
    %c2_i32_65 = arith.constant 2 : i32
    %81 = arith.muli %arg0, %c2_i32_65 : i32
    %c1_i32_66 = arith.constant 1 : i32
    %82 = arith.addi %81, %c1_i32_66 : i32
    %83 = arith.index_cast %82 : i32 to index
    %c1_67 = arith.constant 1 : index
    %84 = memref.load %arg1[%83, %c1_67] : memref<4x8xi32, #tpu.memory_space<smem>>
    %c1_i32_68 = arith.constant 1 : i32
    %c1_i32_69 = arith.constant 1 : i32
    %c1_i32_70 = arith.constant 1 : i32
    %c0_i32_71 = arith.constant 0 : i32
    %85 = tpu.memref_slice %arg2[%84, %c0_i32_71] : memref<1000x128xf32, #tpu.memory_space<any>> -> memref<1x128xf32, #tpu.memory_space<any>>
    %c1_i32_72 = arith.constant 1 : i32
    %c0_i32_73 = arith.constant 0 : i32
    %86 = tpu.memref_slice %arg4[%c1_i32_68, %c1_i32_72, %c0_i32_73] : memref<2x8x128xf32, #tpu.memory_space<vmem>> -> memref<1x1x128xf32, #tpu.memory_space<vmem>>
    %87 = tpu.memref_squeeze %86 : memref<1x1x128xf32, #tpu.memory_space<vmem>> -> memref<1x128xf32, #tpu.memory_space<vmem>>
    %88 = tpu.memref_slice %arg5[%c1_i32_69, %c1_i32_70] : memref<2x8x!tpu.dma_semaphore, #tpu.memory_space<semaphore_mem>> -> memref<1x1x!tpu.dma_semaphore, #tpu.memory_space<semaphore_mem>>
    %89 = tpu.memref_squeeze %88 : memref<1x1x!tpu.dma_semaphore, #tpu.memory_space<semaphore_mem>> -> memref<!tpu.dma_semaphore, #tpu.memory_space<semaphore_mem>>
    tpu.enqueue_dma source(%85 : memref<1x128xf32, #tpu.memory_space<any>>) target(%87 : memref<1x128xf32, #tpu.memory_space<vmem>>) target_semaphore(%89 : memref<!tpu.dma_semaphore, #tpu.memory_space<semaphore_mem>>)
    %c2_i32_74 = arith.constant 2 : i32
    %90 = arith.muli %arg0, %c2_i32_74 : i32
    %c1_i32_75 = arith.constant 1 : i32
    %91 = arith.addi %90, %c1_i32_75 : i32
    %92 = arith.index_cast %91 : i32 to index
    %c2_76 = arith.constant 2 : index
    %93 = memref.load %arg1[%92, %c2_76] : memref<4x8xi32, #tpu.memory_space<smem>>
    %c1_i32_77 = arith.constant 1 : i32
    %c1_i32_78 = arith.constant 1 : i32
    %c2_i32_79 = arith.constant 2 : i32
    %c0_i32_80 = arith.constant 0 : i32
    %94 = tpu.memref_slice %arg2[%93, %c0_i32_80] : memref<1000x128xf32, #tpu.memory_space<any>> -> memref<1x128xf32, #tpu.memory_space<any>>
    %c2_i32_81 = arith.constant 2 : i32
    %c0_i32_82 = arith.constant 0 : i32
    %95 = tpu.memref_slice %arg4[%c1_i32_77, %c2_i32_81, %c0_i32_82] : memref<2x8x128xf32, #tpu.memory_space<vmem>> -> memref<1x1x128xf32, #tpu.memory_space<vmem>>
    %96 = tpu.memref_squeeze %95 : memref<1x1x128xf32, #tpu.memory_space<vmem>> -> memref<1x128xf32, #tpu.memory_space<vmem>>
    %97 = tpu.memref_slice %arg5[%c1_i32_78, %c2_i32_79] : memref<2x8x!tpu.dma_semaphore, #tpu.memory_space<semaphore_mem>> -> memref<1x1x!tpu.dma_semaphore, #tpu.memory_space<semaphore_mem>>
    %98 = tpu.memref_squeeze %97 : memref<1x1x!tpu.dma_semaphore, #tpu.memory_space<semaphore_mem>> -> memref<!tpu.dma_semaphore, #tpu.memory_space<semaphore_mem>>
    tpu.enqueue_dma source(%94 : memref<1x128xf32, #tpu.memory_space<any>>) target(%96 : memref<1x128xf32, #tpu.memory_space<vmem>>) target_semaphore(%98 : memref<!tpu.dma_semaphore, #tpu.memory_space<semaphore_mem>>)
    %c2_i32_83 = arith.constant 2 : i32
    %99 = arith.muli %arg0, %c2_i32_83 : i32
    %c1_i32_84 = arith.constant 1 : i32
    %100 = arith.addi %99, %c1_i32_84 : i32
    %101 = arith.index_cast %100 : i32 to index
    %c3_85 = arith.constant 3 : index
    %102 = memref.load %arg1[%101, %c3_85] : memref<4x8xi32, #tpu.memory_space<smem>>
    %c1_i32_86 = arith.constant 1 : i32
    %c1_i32_87 = arith.constant 1 : i32
    %c3_i32_88 = arith.constant 3 : i32
    %c0_i32_89 = arith.constant 0 : i32
    %103 = tpu.memref_slice %arg2[%102, %c0_i32_89] : memref<1000x128xf32, #tpu.memory_space<any>> -> memref<1x128xf32, #tpu.memory_space<any>>
    %c3_i32_90 = arith.constant 3 : i32
    %c0_i32_91 = arith.constant 0 : i32
    %104 = tpu.memref_slice %arg4[%c1_i32_86, %c3_i32_90, %c0_i32_91] : memref<2x8x128xf32, #tpu.memory_space<vmem>> -> memref<1x1x128xf32, #tpu.memory_space<vmem>>
    %105 = tpu.memref_squeeze %104 : memref<1x1x128xf32, #tpu.memory_space<vmem>> -> memref<1x128xf32, #tpu.memory_space<vmem>>
    %106 = tpu.memref_slice %arg5[%c1_i32_87, %c3_i32_88] : memref<2x8x!tpu.dma_semaphore, #tpu.memory_space<semaphore_mem>> -> memref<1x1x!tpu.dma_semaphore, #tpu.memory_space<semaphore_mem>>
    %107 = tpu.memref_squeeze %106 : memref<1x1x!tpu.dma_semaphore, #tpu.memory_space<semaphore_mem>> -> memref<!tpu.dma_semaphore, #tpu.memory_space<semaphore_mem>>
    tpu.enqueue_dma source(%103 : memref<1x128xf32, #tpu.memory_space<any>>) target(%105 : memref<1x128xf32, #tpu.memory_space<vmem>>) target_semaphore(%107 : memref<!tpu.dma_semaphore, #tpu.memory_space<semaphore_mem>>)
    %c2_i32_92 = arith.constant 2 : i32
    %108 = arith.muli %arg0, %c2_i32_92 : i32
    %c1_i32_93 = arith.constant 1 : i32
    %109 = arith.addi %108, %c1_i32_93 : i32
    %110 = arith.index_cast %109 : i32 to index
    %c4_94 = arith.constant 4 : index
    %111 = memref.load %arg1[%110, %c4_94] : memref<4x8xi32, #tpu.memory_space<smem>>
    %c1_i32_95 = arith.constant 1 : i32
    %c1_i32_96 = arith.constant 1 : i32
    %c4_i32_97 = arith.constant 4 : i32
    %c0_i32_98 = arith.constant 0 : i32
    %112 = tpu.memref_slice %arg2[%111, %c0_i32_98] : memref<1000x128xf32, #tpu.memory_space<any>> -> memref<1x128xf32, #tpu.memory_space<any>>
    %c4_i32_99 = arith.constant 4 : i32
    %c0_i32_100 = arith.constant 0 : i32
    %113 = tpu.memref_slice %arg4[%c1_i32_95, %c4_i32_99, %c0_i32_100] : memref<2x8x128xf32, #tpu.memory_space<vmem>> -> memref<1x1x128xf32, #tpu.memory_space<vmem>>
    %114 = tpu.memref_squeeze %113 : memref<1x1x128xf32, #tpu.memory_space<vmem>> -> memref<1x128xf32, #tpu.memory_space<vmem>>
    %115 = tpu.memref_slice %arg5[%c1_i32_96, %c4_i32_97] : memref<2x8x!tpu.dma_semaphore, #tpu.memory_space<semaphore_mem>> -> memref<1x1x!tpu.dma_semaphore, #tpu.memory_space<semaphore_mem>>
    %116 = tpu.memref_squeeze %115 : memref<1x1x!tpu.dma_semaphore, #tpu.memory_space<semaphore_mem>> -> memref<!tpu.dma_semaphore, #tpu.memory_space<semaphore_mem>>
    tpu.enqueue_dma source(%112 : memref<1x128xf32, #tpu.memory_space<any>>) target(%114 : memref<1x128xf32, #tpu.memory_space<vmem>>) target_semaphore(%116 : memref<!tpu.dma_semaphore, #tpu.memory_space<semaphore_mem>>)
    %c2_i32_101 = arith.constant 2 : i32
    %117 = arith.muli %arg0, %c2_i32_101 : i32
    %c1_i32_102 = arith.constant 1 : i32
    %118 = arith.addi %117, %c1_i32_102 : i32
    %119 = arith.index_cast %118 : i32 to index
    %c5_103 = arith.constant 5 : index
    %120 = memref.load %arg1[%119, %c5_103] : memref<4x8xi32, #tpu.memory_space<smem>>
    %c1_i32_104 = arith.constant 1 : i32
    %c1_i32_105 = arith.constant 1 : i32
    %c5_i32_106 = arith.constant 5 : i32
    %c0_i32_107 = arith.constant 0 : i32
    %121 = tpu.memref_slice %arg2[%120, %c0_i32_107] : memref<1000x128xf32, #tpu.memory_space<any>> -> memref<1x128xf32, #tpu.memory_space<any>>
    %c5_i32_108 = arith.constant 5 : i32
    %c0_i32_109 = arith.constant 0 : i32
    %122 = tpu.memref_slice %arg4[%c1_i32_104, %c5_i32_108, %c0_i32_109] : memref<2x8x128xf32, #tpu.memory_space<vmem>> -> memref<1x1x128xf32, #tpu.memory_space<vmem>>
    %123 = tpu.memref_squeeze %122 : memref<1x1x128xf32, #tpu.memory_space<vmem>> -> memref<1x128xf32, #tpu.memory_space<vmem>>
    %124 = tpu.memref_slice %arg5[%c1_i32_105, %c5_i32_106] : memref<2x8x!tpu.dma_semaphore, #tpu.memory_space<semaphore_mem>> -> memref<1x1x!tpu.dma_semaphore, #tpu.memory_space<semaphore_mem>>
    %125 = tpu.memref_squeeze %124 : memref<1x1x!tpu.dma_semaphore, #tpu.memory_space<semaphore_mem>> -> memref<!tpu.dma_semaphore, #tpu.memory_space<semaphore_mem>>
    tpu.enqueue_dma source(%121 : memref<1x128xf32, #tpu.memory_space<any>>) target(%123 : memref<1x128xf32, #tpu.memory_space<vmem>>) target_semaphore(%125 : memref<!tpu.dma_semaphore, #tpu.memory_space<semaphore_mem>>)
    %c2_i32_110 = arith.constant 2 : i32
    %126 = arith.muli %arg0, %c2_i32_110 : i32
    %c1_i32_111 = arith.constant 1 : i32
    %127 = arith.addi %126, %c1_i32_111 : i32
    %128 = arith.index_cast %127 : i32 to index
    %c6_112 = arith.constant 6 : index
    %129 = memref.load %arg1[%128, %c6_112] : memref<4x8xi32, #tpu.memory_space<smem>>
    %c1_i32_113 = arith.constant 1 : i32
    %c1_i32_114 = arith.constant 1 : i32
    %c6_i32_115 = arith.constant 6 : i32
    %c0_i32_116 = arith.constant 0 : i32
    %130 = tpu.memref_slice %arg2[%129, %c0_i32_116] : memref<1000x128xf32, #tpu.memory_space<any>> -> memref<1x128xf32, #tpu.memory_space<any>>
    %c6_i32_117 = arith.constant 6 : i32
    %c0_i32_118 = arith.constant 0 : i32
    %131 = tpu.memref_slice %arg4[%c1_i32_113, %c6_i32_117, %c0_i32_118] : memref<2x8x128xf32, #tpu.memory_space<vmem>> -> memref<1x1x128xf32, #tpu.memory_space<vmem>>
    %132 = tpu.memref_squeeze %131 : memref<1x1x128xf32, #tpu.memory_space<vmem>> -> memref<1x128xf32, #tpu.memory_space<vmem>>
    %133 = tpu.memref_slice %arg5[%c1_i32_114, %c6_i32_115] : memref<2x8x!tpu.dma_semaphore, #tpu.memory_space<semaphore_mem>> -> memref<1x1x!tpu.dma_semaphore, #tpu.memory_space<semaphore_mem>>
    %134 = tpu.memref_squeeze %133 : memref<1x1x!tpu.dma_semaphore, #tpu.memory_space<semaphore_mem>> -> memref<!tpu.dma_semaphore, #tpu.memory_space<semaphore_mem>>
    tpu.enqueue_dma source(%130 : memref<1x128xf32, #tpu.memory_space<any>>) target(%132 : memref<1x128xf32, #tpu.memory_space<vmem>>) target_semaphore(%134 : memref<!tpu.dma_semaphore, #tpu.memory_space<semaphore_mem>>)
    %c2_i32_119 = arith.constant 2 : i32
    %135 = arith.muli %arg0, %c2_i32_119 : i32
    %c1_i32_120 = arith.constant 1 : i32
    %136 = arith.addi %135, %c1_i32_120 : i32
    %137 = arith.index_cast %136 : i32 to index
    %c7_121 = arith.constant 7 : index
    %138 = memref.load %arg1[%137, %c7_121] : memref<4x8xi32, #tpu.memory_space<smem>>
    %c1_i32_122 = arith.constant 1 : i32
    %c1_i32_123 = arith.constant 1 : i32
    %c7_i32_124 = arith.constant 7 : i32
    %c0_i32_125 = arith.constant 0 : i32
    %139 = tpu.memref_slice %arg2[%138, %c0_i32_125] : memref<1000x128xf32, #tpu.memory_space<any>> -> memref<1x128xf32, #tpu.memory_space<any>>
    %c7_i32_126 = arith.constant 7 : i32
    %c0_i32_127 = arith.constant 0 : i32
    %140 = tpu.memref_slice %arg4[%c1_i32_122, %c7_i32_126, %c0_i32_127] : memref<2x8x128xf32, #tpu.memory_space<vmem>> -> memref<1x1x128xf32, #tpu.memory_space<vmem>>
    %141 = tpu.memref_squeeze %140 : memref<1x1x128xf32, #tpu.memory_space<vmem>> -> memref<1x128xf32, #tpu.memory_space<vmem>>
    %142 = tpu.memref_slice %arg5[%c1_i32_123, %c7_i32_124] : memref<2x8x!tpu.dma_semaphore, #tpu.memory_space<semaphore_mem>> -> memref<1x1x!tpu.dma_semaphore, #tpu.memory_space<semaphore_mem>>
    %143 = tpu.memref_squeeze %142 : memref<1x1x!tpu.dma_semaphore, #tpu.memory_space<semaphore_mem>> -> memref<!tpu.dma_semaphore, #tpu.memory_space<semaphore_mem>>
    tpu.enqueue_dma source(%139 : memref<1x128xf32, #tpu.memory_space<any>>) target(%141 : memref<1x128xf32, #tpu.memory_space<vmem>>) target_semaphore(%143 : memref<!tpu.dma_semaphore, #tpu.memory_space<semaphore_mem>>)
    %c0_i32_128 = arith.constant 0 : i32
    %c0_i32_129 = arith.constant 0 : i32
    %c0_i32_130 = arith.constant 0 : i32
    %c0_i32_131 = arith.constant 0 : i32
    %144 = tpu.memref_slice %arg2[%3, %c0_i32_131] : memref<1000x128xf32, #tpu.memory_space<any>> -> memref<1x128xf32, #tpu.memory_space<any>>
    %c0_i32_132 = arith.constant 0 : i32
    %c0_i32_133 = arith.constant 0 : i32
    %145 = tpu.memref_slice %arg4[%c0_i32_128, %c0_i32_132, %c0_i32_133] : memref<2x8x128xf32, #tpu.memory_space<vmem>> -> memref<1x1x128xf32, #tpu.memory_space<vmem>>
    %146 = tpu.memref_squeeze %145 : memref<1x1x128xf32, #tpu.memory_space<vmem>> -> memref<1x128xf32, #tpu.memory_space<vmem>>
    %147 = tpu.memref_slice %arg5[%c0_i32_129, %c0_i32_130] : memref<2x8x!tpu.dma_semaphore, #tpu.memory_space<semaphore_mem>> -> memref<1x1x!tpu.dma_semaphore, #tpu.memory_space<semaphore_mem>>
    %148 = tpu.memref_squeeze %147 : memref<1x1x!tpu.dma_semaphore, #tpu.memory_space<semaphore_mem>> -> memref<!tpu.dma_semaphore, #tpu.memory_space<semaphore_mem>>
    tpu.wait_dma2 semaphore(%148 : memref<!tpu.dma_semaphore, #tpu.memory_space<semaphore_mem>>) src(%144 : memref<1x128xf32, #tpu.memory_space<any>>) dst(%146 : memref<1x128xf32, #tpu.memory_space<vmem>>)
    %c0_i32_134 = arith.constant 0 : i32
    %c0_i32_135 = arith.constant 0 : i32
    %c1_i32_136 = arith.constant 1 : i32
    %c0_i32_137 = arith.constant 0 : i32
    %149 = tpu.memref_slice %arg2[%12, %c0_i32_137] : memref<1000x128xf32, #tpu.memory_space<any>> -> memref<1x128xf32, #tpu.memory_space<any>>
    %c1_i32_138 = arith.constant 1 : i32
    %c0_i32_139 = arith.constant 0 : i32
    %150 = tpu.memref_slice %arg4[%c0_i32_134, %c1_i32_138, %c0_i32_139] : memref<2x8x128xf32, #tpu.memory_space<vmem>> -> memref<1x1x128xf32, #tpu.memory_space<vmem>>
    %151 = tpu.memref_squeeze %150 : memref<1x1x128xf32, #tpu.memory_space<vmem>> -> memref<1x128xf32, #tpu.memory_space<vmem>>
    %152 = tpu.memref_slice %arg5[%c0_i32_135, %c1_i32_136] : memref<2x8x!tpu.dma_semaphore, #tpu.memory_space<semaphore_mem>> -> memref<1x1x!tpu.dma_semaphore, #tpu.memory_space<semaphore_mem>>
    %153 = tpu.memref_squeeze %152 : memref<1x1x!tpu.dma_semaphore, #tpu.memory_space<semaphore_mem>> -> memref<!tpu.dma_semaphore, #tpu.memory_space<semaphore_mem>>
    tpu.wait_dma2 semaphore(%153 : memref<!tpu.dma_semaphore, #tpu.memory_space<semaphore_mem>>) src(%149 : memref<1x128xf32, #tpu.memory_space<any>>) dst(%151 : memref<1x128xf32, #tpu.memory_space<vmem>>)
    %c0_i32_140 = arith.constant 0 : i32
    %c0_i32_141 = arith.constant 0 : i32
    %c2_i32_142 = arith.constant 2 : i32
    %c0_i32_143 = arith.constant 0 : i32
    %154 = tpu.memref_slice %arg2[%21, %c0_i32_143] : memref<1000x128xf32, #tpu.memory_space<any>> -> memref<1x128xf32, #tpu.memory_space<any>>
    %c2_i32_144 = arith.constant 2 : i32
    %c0_i32_145 = arith.constant 0 : i32
    %155 = tpu.memref_slice %arg4[%c0_i32_140, %c2_i32_144, %c0_i32_145] : memref<2x8x128xf32, #tpu.memory_space<vmem>> -> memref<1x1x128xf32, #tpu.memory_space<vmem>>
    %156 = tpu.memref_squeeze %155 : memref<1x1x128xf32, #tpu.memory_space<vmem>> -> memref<1x128xf32, #tpu.memory_space<vmem>>
    %157 = tpu.memref_slice %arg5[%c0_i32_141, %c2_i32_142] : memref<2x8x!tpu.dma_semaphore, #tpu.memory_space<semaphore_mem>> -> memref<1x1x!tpu.dma_semaphore, #tpu.memory_space<semaphore_mem>>
    %158 = tpu.memref_squeeze %157 : memref<1x1x!tpu.dma_semaphore, #tpu.memory_space<semaphore_mem>> -> memref<!tpu.dma_semaphore, #tpu.memory_space<semaphore_mem>>
    tpu.wait_dma2 semaphore(%158 : memref<!tpu.dma_semaphore, #tpu.memory_space<semaphore_mem>>) src(%154 : memref<1x128xf32, #tpu.memory_space<any>>) dst(%156 : memref<1x128xf32, #tpu.memory_space<vmem>>)
    %c0_i32_146 = arith.constant 0 : i32
    %c0_i32_147 = arith.constant 0 : i32
    %c3_i32_148 = arith.constant 3 : i32
    %c0_i32_149 = arith.constant 0 : i32
    %159 = tpu.memref_slice %arg2[%30, %c0_i32_149] : memref<1000x128xf32, #tpu.memory_space<any>> -> memref<1x128xf32, #tpu.memory_space<any>>
    %c3_i32_150 = arith.constant 3 : i32
    %c0_i32_151 = arith.constant 0 : i32
    %160 = tpu.memref_slice %arg4[%c0_i32_146, %c3_i32_150, %c0_i32_151] : memref<2x8x128xf32, #tpu.memory_space<vmem>> -> memref<1x1x128xf32, #tpu.memory_space<vmem>>
    %161 = tpu.memref_squeeze %160 : memref<1x1x128xf32, #tpu.memory_space<vmem>> -> memref<1x128xf32, #tpu.memory_space<vmem>>
    %162 = tpu.memref_slice %arg5[%c0_i32_147, %c3_i32_148] : memref<2x8x!tpu.dma_semaphore, #tpu.memory_space<semaphore_mem>> -> memref<1x1x!tpu.dma_semaphore, #tpu.memory_space<semaphore_mem>>
    %163 = tpu.memref_squeeze %162 : memref<1x1x!tpu.dma_semaphore, #tpu.memory_space<semaphore_mem>> -> memref<!tpu.dma_semaphore, #tpu.memory_space<semaphore_mem>>
    tpu.wait_dma2 semaphore(%163 : memref<!tpu.dma_semaphore, #tpu.memory_space<semaphore_mem>>) src(%159 : memref<1x128xf32, #tpu.memory_space<any>>) dst(%161 : memref<1x128xf32, #tpu.memory_space<vmem>>)
    %c0_i32_152 = arith.constant 0 : i32
    %c0_i32_153 = arith.constant 0 : i32
    %c4_i32_154 = arith.constant 4 : i32
    %c0_i32_155 = arith.constant 0 : i32
    %164 = tpu.memref_slice %arg2[%39, %c0_i32_155] : memref<1000x128xf32, #tpu.memory_space<any>> -> memref<1x128xf32, #tpu.memory_space<any>>
    %c4_i32_156 = arith.constant 4 : i32
    %c0_i32_157 = arith.constant 0 : i32
    %165 = tpu.memref_slice %arg4[%c0_i32_152, %c4_i32_156, %c0_i32_157] : memref<2x8x128xf32, #tpu.memory_space<vmem>> -> memref<1x1x128xf32, #tpu.memory_space<vmem>>
    %166 = tpu.memref_squeeze %165 : memref<1x1x128xf32, #tpu.memory_space<vmem>> -> memref<1x128xf32, #tpu.memory_space<vmem>>
    %167 = tpu.memref_slice %arg5[%c0_i32_153, %c4_i32_154] : memref<2x8x!tpu.dma_semaphore, #tpu.memory_space<semaphore_mem>> -> memref<1x1x!tpu.dma_semaphore, #tpu.memory_space<semaphore_mem>>
    %168 = tpu.memref_squeeze %167 : memref<1x1x!tpu.dma_semaphore, #tpu.memory_space<semaphore_mem>> -> memref<!tpu.dma_semaphore, #tpu.memory_space<semaphore_mem>>
    tpu.wait_dma2 semaphore(%168 : memref<!tpu.dma_semaphore, #tpu.memory_space<semaphore_mem>>) src(%164 : memref<1x128xf32, #tpu.memory_space<any>>) dst(%166 : memref<1x128xf32, #tpu.memory_space<vmem>>)
    %c0_i32_158 = arith.constant 0 : i32
    %c0_i32_159 = arith.constant 0 : i32
    %c5_i32_160 = arith.constant 5 : i32
    %c0_i32_161 = arith.constant 0 : i32
    %169 = tpu.memref_slice %arg2[%48, %c0_i32_161] : memref<1000x128xf32, #tpu.memory_space<any>> -> memref<1x128xf32, #tpu.memory_space<any>>
    %c5_i32_162 = arith.constant 5 : i32
    %c0_i32_163 = arith.constant 0 : i32
    %170 = tpu.memref_slice %arg4[%c0_i32_158, %c5_i32_162, %c0_i32_163] : memref<2x8x128xf32, #tpu.memory_space<vmem>> -> memref<1x1x128xf32, #tpu.memory_space<vmem>>
    %171 = tpu.memref_squeeze %170 : memref<1x1x128xf32, #tpu.memory_space<vmem>> -> memref<1x128xf32, #tpu.memory_space<vmem>>
    %172 = tpu.memref_slice %arg5[%c0_i32_159, %c5_i32_160] : memref<2x8x!tpu.dma_semaphore, #tpu.memory_space<semaphore_mem>> -> memref<1x1x!tpu.dma_semaphore, #tpu.memory_space<semaphore_mem>>
    %173 = tpu.memref_squeeze %172 : memref<1x1x!tpu.dma_semaphore, #tpu.memory_space<semaphore_mem>> -> memref<!tpu.dma_semaphore, #tpu.memory_space<semaphore_mem>>
    tpu.wait_dma2 semaphore(%173 : memref<!tpu.dma_semaphore, #tpu.memory_space<semaphore_mem>>) src(%169 : memref<1x128xf32, #tpu.memory_space<any>>) dst(%171 : memref<1x128xf32, #tpu.memory_space<vmem>>)
    %c0_i32_164 = arith.constant 0 : i32
    %c0_i32_165 = arith.constant 0 : i32
    %c6_i32_166 = arith.constant 6 : i32
    %c0_i32_167 = arith.constant 0 : i32
    %174 = tpu.memref_slice %arg2[%57, %c0_i32_167] : memref<1000x128xf32, #tpu.memory_space<any>> -> memref<1x128xf32, #tpu.memory_space<any>>
    %c6_i32_168 = arith.constant 6 : i32
    %c0_i32_169 = arith.constant 0 : i32
    %175 = tpu.memref_slice %arg4[%c0_i32_164, %c6_i32_168, %c0_i32_169] : memref<2x8x128xf32, #tpu.memory_space<vmem>> -> memref<1x1x128xf32, #tpu.memory_space<vmem>>
    %176 = tpu.memref_squeeze %175 : memref<1x1x128xf32, #tpu.memory_space<vmem>> -> memref<1x128xf32, #tpu.memory_space<vmem>>
    %177 = tpu.memref_slice %arg5[%c0_i32_165, %c6_i32_166] : memref<2x8x!tpu.dma_semaphore, #tpu.memory_space<semaphore_mem>> -> memref<1x1x!tpu.dma_semaphore, #tpu.memory_space<semaphore_mem>>
    %178 = tpu.memref_squeeze %177 : memref<1x1x!tpu.dma_semaphore, #tpu.memory_space<semaphore_mem>> -> memref<!tpu.dma_semaphore, #tpu.memory_space<semaphore_mem>>
    tpu.wait_dma2 semaphore(%178 : memref<!tpu.dma_semaphore, #tpu.memory_space<semaphore_mem>>) src(%174 : memref<1x128xf32, #tpu.memory_space<any>>) dst(%176 : memref<1x128xf32, #tpu.memory_space<vmem>>)
    %c0_i32_170 = arith.constant 0 : i32
    %c0_i32_171 = arith.constant 0 : i32
    %c7_i32_172 = arith.constant 7 : i32
    %c0_i32_173 = arith.constant 0 : i32
    %179 = tpu.memref_slice %arg2[%66, %c0_i32_173] : memref<1000x128xf32, #tpu.memory_space<any>> -> memref<1x128xf32, #tpu.memory_space<any>>
    %c7_i32_174 = arith.constant 7 : i32
    %c0_i32_175 = arith.constant 0 : i32
    %180 = tpu.memref_slice %arg4[%c0_i32_170, %c7_i32_174, %c0_i32_175] : memref<2x8x128xf32, #tpu.memory_space<vmem>> -> memref<1x1x128xf32, #tpu.memory_space<vmem>>
    %181 = tpu.memref_squeeze %180 : memref<1x1x128xf32, #tpu.memory_space<vmem>> -> memref<1x128xf32, #tpu.memory_space<vmem>>
    %182 = tpu.memref_slice %arg5[%c0_i32_171, %c7_i32_172] : memref<2x8x!tpu.dma_semaphore, #tpu.memory_space<semaphore_mem>> -> memref<1x1x!tpu.dma_semaphore, #tpu.memory_space<semaphore_mem>>
    %183 = tpu.memref_squeeze %182 : memref<1x1x!tpu.dma_semaphore, #tpu.memory_space<semaphore_mem>> -> memref<!tpu.dma_semaphore, #tpu.memory_space<semaphore_mem>>
    tpu.wait_dma2 semaphore(%183 : memref<!tpu.dma_semaphore, #tpu.memory_space<semaphore_mem>>) src(%179 : memref<1x128xf32, #tpu.memory_space<any>>) dst(%181 : memref<1x128xf32, #tpu.memory_space<vmem>>)
    %c1_i32_176 = arith.constant 1 : i32
    %c1_i32_177 = arith.constant 1 : i32
    %c0_i32_178 = arith.constant 0 : i32
    %c0_i32_179 = arith.constant 0 : i32
    %184 = tpu.memref_slice %arg2[%75, %c0_i32_179] : memref<1000x128xf32, #tpu.memory_space<any>> -> memref<1x128xf32, #tpu.memory_space<any>>
    %c0_i32_180 = arith.constant 0 : i32
    %c0_i32_181 = arith.constant 0 : i32
    %185 = tpu.memref_slice %arg4[%c1_i32_176, %c0_i32_180, %c0_i32_181] : memref<2x8x128xf32, #tpu.memory_space<vmem>> -> memref<1x1x128xf32, #tpu.memory_space<vmem>>
    %186 = tpu.memref_squeeze %185 : memref<1x1x128xf32, #tpu.memory_space<vmem>> -> memref<1x128xf32, #tpu.memory_space<vmem>>
    %187 = tpu.memref_slice %arg5[%c1_i32_177, %c0_i32_178] : memref<2x8x!tpu.dma_semaphore, #tpu.memory_space<semaphore_mem>> -> memref<1x1x!tpu.dma_semaphore, #tpu.memory_space<semaphore_mem>>
    %188 = tpu.memref_squeeze %187 : memref<1x1x!tpu.dma_semaphore, #tpu.memory_space<semaphore_mem>> -> memref<!tpu.dma_semaphore, #tpu.memory_space<semaphore_mem>>
    tpu.wait_dma2 semaphore(%188 : memref<!tpu.dma_semaphore, #tpu.memory_space<semaphore_mem>>) src(%184 : memref<1x128xf32, #tpu.memory_space<any>>) dst(%186 : memref<1x128xf32, #tpu.memory_space<vmem>>)
    %c1_i32_182 = arith.constant 1 : i32
    %c1_i32_183 = arith.constant 1 : i32
    %c1_i32_184 = arith.constant 1 : i32
    %c0_i32_185 = arith.constant 0 : i32
    %189 = tpu.memref_slice %arg2[%84, %c0_i32_185] : memref<1000x128xf32, #tpu.memory_space<any>> -> memref<1x128xf32, #tpu.memory_space<any>>
    %c1_i32_186 = arith.constant 1 : i32
    %c0_i32_187 = arith.constant 0 : i32
    %190 = tpu.memref_slice %arg4[%c1_i32_182, %c1_i32_186, %c0_i32_187] : memref<2x8x128xf32, #tpu.memory_space<vmem>> -> memref<1x1x128xf32, #tpu.memory_space<vmem>>
    %191 = tpu.memref_squeeze %190 : memref<1x1x128xf32, #tpu.memory_space<vmem>> -> memref<1x128xf32, #tpu.memory_space<vmem>>
    %192 = tpu.memref_slice %arg5[%c1_i32_183, %c1_i32_184] : memref<2x8x!tpu.dma_semaphore, #tpu.memory_space<semaphore_mem>> -> memref<1x1x!tpu.dma_semaphore, #tpu.memory_space<semaphore_mem>>
    %193 = tpu.memref_squeeze %192 : memref<1x1x!tpu.dma_semaphore, #tpu.memory_space<semaphore_mem>> -> memref<!tpu.dma_semaphore, #tpu.memory_space<semaphore_mem>>
    tpu.wait_dma2 semaphore(%193 : memref<!tpu.dma_semaphore, #tpu.memory_space<semaphore_mem>>) src(%189 : memref<1x128xf32, #tpu.memory_space<any>>) dst(%191 : memref<1x128xf32, #tpu.memory_space<vmem>>)
    %c1_i32_188 = arith.constant 1 : i32
    %c1_i32_189 = arith.constant 1 : i32
    %c2_i32_190 = arith.constant 2 : i32
    %c0_i32_191 = arith.constant 0 : i32
    %194 = tpu.memref_slice %arg2[%93, %c0_i32_191] : memref<1000x128xf32, #tpu.memory_space<any>> -> memref<1x128xf32, #tpu.memory_space<any>>
    %c2_i32_192 = arith.constant 2 : i32
    %c0_i32_193 = arith.constant 0 : i32
    %195 = tpu.memref_slice %arg4[%c1_i32_188, %c2_i32_192, %c0_i32_193] : memref<2x8x128xf32, #tpu.memory_space<vmem>> -> memref<1x1x128xf32, #tpu.memory_space<vmem>>
    %196 = tpu.memref_squeeze %195 : memref<1x1x128xf32, #tpu.memory_space<vmem>> -> memref<1x128xf32, #tpu.memory_space<vmem>>
    %197 = tpu.memref_slice %arg5[%c1_i32_189, %c2_i32_190] : memref<2x8x!tpu.dma_semaphore, #tpu.memory_space<semaphore_mem>> -> memref<1x1x!tpu.dma_semaphore, #tpu.memory_space<semaphore_mem>>
    %198 = tpu.memref_squeeze %197 : memref<1x1x!tpu.dma_semaphore, #tpu.memory_space<semaphore_mem>> -> memref<!tpu.dma_semaphore, #tpu.memory_space<semaphore_mem>>
    tpu.wait_dma2 semaphore(%198 : memref<!tpu.dma_semaphore, #tpu.memory_space<semaphore_mem>>) src(%194 : memref<1x128xf32, #tpu.memory_space<any>>) dst(%196 : memref<1x128xf32, #tpu.memory_space<vmem>>)
    %c1_i32_194 = arith.constant 1 : i32
    %c1_i32_195 = arith.constant 1 : i32
    %c3_i32_196 = arith.constant 3 : i32
    %c0_i32_197 = arith.constant 0 : i32
    %199 = tpu.memref_slice %arg2[%102, %c0_i32_197] : memref<1000x128xf32, #tpu.memory_space<any>> -> memref<1x128xf32, #tpu.memory_space<any>>
    %c3_i32_198 = arith.constant 3 : i32
    %c0_i32_199 = arith.constant 0 : i32
    %200 = tpu.memref_slice %arg4[%c1_i32_194, %c3_i32_198, %c0_i32_199] : memref<2x8x128xf32, #tpu.memory_space<vmem>> -> memref<1x1x128xf32, #tpu.memory_space<vmem>>
    %201 = tpu.memref_squeeze %200 : memref<1x1x128xf32, #tpu.memory_space<vmem>> -> memref<1x128xf32, #tpu.memory_space<vmem>>
    %202 = tpu.memref_slice %arg5[%c1_i32_195, %c3_i32_196] : memref<2x8x!tpu.dma_semaphore, #tpu.memory_space<semaphore_mem>> -> memref<1x1x!tpu.dma_semaphore, #tpu.memory_space<semaphore_mem>>
    %203 = tpu.memref_squeeze %202 : memref<1x1x!tpu.dma_semaphore, #tpu.memory_space<semaphore_mem>> -> memref<!tpu.dma_semaphore, #tpu.memory_space<semaphore_mem>>
    tpu.wait_dma2 semaphore(%203 : memref<!tpu.dma_semaphore, #tpu.memory_space<semaphore_mem>>) src(%199 : memref<1x128xf32, #tpu.memory_space<any>>) dst(%201 : memref<1x128xf32, #tpu.memory_space<vmem>>)
    %c1_i32_200 = arith.constant 1 : i32
    %c1_i32_201 = arith.constant 1 : i32
    %c4_i32_202 = arith.constant 4 : i32
    %c0_i32_203 = arith.constant 0 : i32
    %204 = tpu.memref_slice %arg2[%111, %c0_i32_203] : memref<1000x128xf32, #tpu.memory_space<any>> -> memref<1x128xf32, #tpu.memory_space<any>>
    %c4_i32_204 = arith.constant 4 : i32
    %c0_i32_205 = arith.constant 0 : i32
    %205 = tpu.memref_slice %arg4[%c1_i32_200, %c4_i32_204, %c0_i32_205] : memref<2x8x128xf32, #tpu.memory_space<vmem>> -> memref<1x1x128xf32, #tpu.memory_space<vmem>>
    %206 = tpu.memref_squeeze %205 : memref<1x1x128xf32, #tpu.memory_space<vmem>> -> memref<1x128xf32, #tpu.memory_space<vmem>>
    %207 = tpu.memref_slice %arg5[%c1_i32_201, %c4_i32_202] : memref<2x8x!tpu.dma_semaphore, #tpu.memory_space<semaphore_mem>> -> memref<1x1x!tpu.dma_semaphore, #tpu.memory_space<semaphore_mem>>
    %208 = tpu.memref_squeeze %207 : memref<1x1x!tpu.dma_semaphore, #tpu.memory_space<semaphore_mem>> -> memref<!tpu.dma_semaphore, #tpu.memory_space<semaphore_mem>>
    tpu.wait_dma2 semaphore(%208 : memref<!tpu.dma_semaphore, #tpu.memory_space<semaphore_mem>>) src(%204 : memref<1x128xf32, #tpu.memory_space<any>>) dst(%206 : memref<1x128xf32, #tpu.memory_space<vmem>>)
    %c1_i32_206 = arith.constant 1 : i32
    %c1_i32_207 = arith.constant 1 : i32
    %c5_i32_208 = arith.constant 5 : i32
    %c0_i32_209 = arith.constant 0 : i32
    %209 = tpu.memref_slice %arg2[%120, %c0_i32_209] : memref<1000x128xf32, #tpu.memory_space<any>> -> memref<1x128xf32, #tpu.memory_space<any>>
    %c5_i32_210 = arith.constant 5 : i32
    %c0_i32_211 = arith.constant 0 : i32
    %210 = tpu.memref_slice %arg4[%c1_i32_206, %c5_i32_210, %c0_i32_211] : memref<2x8x128xf32, #tpu.memory_space<vmem>> -> memref<1x1x128xf32, #tpu.memory_space<vmem>>
    %211 = tpu.memref_squeeze %210 : memref<1x1x128xf32, #tpu.memory_space<vmem>> -> memref<1x128xf32, #tpu.memory_space<vmem>>
    %212 = tpu.memref_slice %arg5[%c1_i32_207, %c5_i32_208] : memref<2x8x!tpu.dma_semaphore, #tpu.memory_space<semaphore_mem>> -> memref<1x1x!tpu.dma_semaphore, #tpu.memory_space<semaphore_mem>>
    %213 = tpu.memref_squeeze %212 : memref<1x1x!tpu.dma_semaphore, #tpu.memory_space<semaphore_mem>> -> memref<!tpu.dma_semaphore, #tpu.memory_space<semaphore_mem>>
    tpu.wait_dma2 semaphore(%213 : memref<!tpu.dma_semaphore, #tpu.memory_space<semaphore_mem>>) src(%209 : memref<1x128xf32, #tpu.memory_space<any>>) dst(%211 : memref<1x128xf32, #tpu.memory_space<vmem>>)
    %c1_i32_212 = arith.constant 1 : i32
    %c1_i32_213 = arith.constant 1 : i32
    %c6_i32_214 = arith.constant 6 : i32
    %c0_i32_215 = arith.constant 0 : i32
    %214 = tpu.memref_slice %arg2[%129, %c0_i32_215] : memref<1000x128xf32, #tpu.memory_space<any>> -> memref<1x128xf32, #tpu.memory_space<any>>
    %c6_i32_216 = arith.constant 6 : i32
    %c0_i32_217 = arith.constant 0 : i32
    %215 = tpu.memref_slice %arg4[%c1_i32_212, %c6_i32_216, %c0_i32_217] : memref<2x8x128xf32, #tpu.memory_space<vmem>> -> memref<1x1x128xf32, #tpu.memory_space<vmem>>
    %216 = tpu.memref_squeeze %215 : memref<1x1x128xf32, #tpu.memory_space<vmem>> -> memref<1x128xf32, #tpu.memory_space<vmem>>
    %217 = tpu.memref_slice %arg5[%c1_i32_213, %c6_i32_214] : memref<2x8x!tpu.dma_semaphore, #tpu.memory_space<semaphore_mem>> -> memref<1x1x!tpu.dma_semaphore, #tpu.memory_space<semaphore_mem>>
    %218 = tpu.memref_squeeze %217 : memref<1x1x!tpu.dma_semaphore, #tpu.memory_space<semaphore_mem>> -> memref<!tpu.dma_semaphore, #tpu.memory_space<semaphore_mem>>
    tpu.wait_dma2 semaphore(%218 : memref<!tpu.dma_semaphore, #tpu.memory_space<semaphore_mem>>) src(%214 : memref<1x128xf32, #tpu.memory_space<any>>) dst(%216 : memref<1x128xf32, #tpu.memory_space<vmem>>)
    %c1_i32_218 = arith.constant 1 : i32
    %c1_i32_219 = arith.constant 1 : i32
    %c7_i32_220 = arith.constant 7 : i32
    %c0_i32_221 = arith.constant 0 : i32
    %219 = tpu.memref_slice %arg2[%138, %c0_i32_221] : memref<1000x128xf32, #tpu.memory_space<any>> -> memref<1x128xf32, #tpu.memory_space<any>>
    %c7_i32_222 = arith.constant 7 : i32
    %c0_i32_223 = arith.constant 0 : i32
    %220 = tpu.memref_slice %arg4[%c1_i32_218, %c7_i32_222, %c0_i32_223] : memref<2x8x128xf32, #tpu.memory_space<vmem>> -> memref<1x1x128xf32, #tpu.memory_space<vmem>>
    %221 = tpu.memref_squeeze %220 : memref<1x1x128xf32, #tpu.memory_space<vmem>> -> memref<1x128xf32, #tpu.memory_space<vmem>>
    %222 = tpu.memref_slice %arg5[%c1_i32_219, %c7_i32_220] : memref<2x8x!tpu.dma_semaphore, #tpu.memory_space<semaphore_mem>> -> memref<1x1x!tpu.dma_semaphore, #tpu.memory_space<semaphore_mem>>
    %223 = tpu.memref_squeeze %222 : memref<1x1x!tpu.dma_semaphore, #tpu.memory_space<semaphore_mem>> -> memref<!tpu.dma_semaphore, #tpu.memory_space<semaphore_mem>>
    tpu.wait_dma2 semaphore(%223 : memref<!tpu.dma_semaphore, #tpu.memory_space<semaphore_mem>>) src(%219 : memref<1x128xf32, #tpu.memory_space<any>>) dst(%221 : memref<1x128xf32, #tpu.memory_space<vmem>>)
    %c0_224 = arith.constant 0 : index
    %c0_225 = arith.constant 0 : index
    %c0_226 = arith.constant 0 : index
    %224 = vector.load %arg4[%c0_224, %c0_225, %c0_226] : memref<2x8x128xf32, #tpu.memory_space<vmem>>, vector<2x8x128xf32>
    %c0_227 = arith.constant 0 : index
    %c0_228 = arith.constant 0 : index
    %225 = vector.load %arg3[%c0_227, %c0_228] : memref<8x128xf32, #tpu.memory_space<vmem>>, vector<8x128xf32>
    %226 = vector.shape_cast %225 : vector<8x128xf32> to vector<1x8x128xf32>
    %227 = vector.broadcast %226 : vector<1x8x128xf32> to vector<2x8x128xf32>
    %228 = arith.addf %224, %227 : vector<2x8x128xf32>
    %c0_229 = arith.constant 0 : index
    %c0_230 = arith.constant 0 : index
    %c0_231 = arith.constant 0 : index
    %229 = vector.load %arg4[%c0_229, %c0_230, %c0_231] : memref<2x8x128xf32, #tpu.memory_space<vmem>>, vector<2x8x128xf32>
    tpu.vector_store %arg4[%c0_229, %c0_230, %c0_231], %228 {strides = array<i32>} : memref<2x8x128xf32, #tpu.memory_space<vmem>>, vector<2x8x128xf32>,
    return
  }
  func.func @transform_1(%arg0: i32, %arg1: memref<4x8xi32, #tpu.memory_space<smem>>) -> (i32, i32) {
    %c0_i32 = arith.constant 0 : i32
    %c0_i32_0 = arith.constant 0 : i32
    %c0_i32_1 = arith.constant 0 : i32
    return %c0_i32, %c0_i32_0 : i32, i32
  }
  func.func @transform_2(%arg0: i32, %arg1: memref<4x8xi32, #tpu.memory_space<smem>>) -> (i32, i32, i32) {
    %c0_i32 = arith.constant 0 : i32
    %c0_i32_0 = arith.constant 0 : i32
    %c0_i32_1 = arith.constant 0 : i32
    return %arg0, %c0_i32, %c0_i32_0 : i32, i32, i32
  }
}

</mosaic_0001>

<llo_original>
// kernel: tpu_custom_call.1
$region0: #{tpu_custom_call.1}
  #allocation0 [shape = 'u32[]', space=smem, size = 0x4, offset = 0x4, fixed_abs, tag = 'smem constant byte address 0x4 - core index']
  #allocation1 [shape = 'u32[144,128]{1,0:T(1,128)}', space=vmem, size = 0x12000, scoped, tag = 'internal scratch']
  #allocation2 [shape = 's32[16]{0}', space=sflag, size = 0x40, scoped, tag = 'scratch operand']
  #allocation3 [shape = 's32[1]{0}', space=sflag, size = 0x4, scoped, tag = 'scoped memory for tpu_custom_call.1']
  #allocation4 [shape = 'u8[2048]{0}', space=smem, size = 0x800, scoped, tag = 'prefetched SMEM operand 0']
  #allocation9 [shape = 's32[]', space=sflag, size = 0x4, offset = 0, fixed_abs, tag = 'sflag constant byte address 0x0 - dummy sync flag']
  #allocation10 [shape = 's32[]', space=sflag, size = 0x4, offset = 0, fixed_abs, tag = 'sflag constant byte address 0x0 - dummy sync flag']
  #allocation11 [shape = 'u32[]', space=smem, size = 0x4, offset = 0x44, fixed_abs, tag = 'smem constant byte address 0x44 - assertion arg 0']
  #allocation12 [shape = 'u32[]', space=smem, size = 0x4, offset = 0x48, fixed_abs, tag = 'smem constant byte address 0x48 - assertion arg 1']
  #allocation13 [shape = 's32[]', space=sflag, size = 0x4, offset = 0, fixed_abs, tag = 'sflag constant byte address 0x0 - dummy sync flag']
  #allocation14 [shape = 's32[]', space=sflag, size = 0x4, offset = 0, fixed_abs, tag = 'sflag constant byte address 0x0 - dummy sync flag']
  #allocation15 [shape = 's32[]', space=sflag, size = 0x4, offset = 0, fixed_abs, tag = 'sflag constant byte address 0x0 - dummy sync flag']
  #allocation16 [shape = 's32[]', space=sflag, size = 0x4, offset = 0, fixed_abs, tag = 'sflag constant byte address 0x0 - dummy sync flag']
  #allocation17 [shape = 's32[]', space=sflag, size = 0x4, offset = 0, fixed_abs, tag = 'sflag constant byte address 0x0 - dummy sync flag']
  #allocation18 [shape = 's32[]', space=sflag, size = 0x4, offset = 0, fixed_abs, tag = 'sflag constant byte address 0x0 - dummy sync flag']
  #allocation19 [shape = 's32[]', space=sflag, size = 0x4, offset = 0, fixed_abs, tag = 'sflag constant byte address 0x0 - dummy sync flag']
  #allocation20 [shape = 's32[]', space=sflag, size = 0x4, offset = 0, fixed_abs, tag = 'sflag constant byte address 0x0 - dummy sync flag']
  #allocation21 [shape = 's32[]', space=sflag, size = 0x4, offset = 0, fixed_abs, tag = 'sflag constant byte address 0x0 - dummy sync flag']
  #allocation22 [shape = 's32[]', space=sflag, size = 0x4, offset = 0, fixed_abs, tag = 'sflag constant byte address 0x0 - dummy sync flag']
  #allocation23 [shape = 's32[]', space=sflag, size = 0x4, offset = 0, fixed_abs, tag = 'sflag constant byte address 0x0 - dummy sync flag']
  #allocation24 [shape = 's32[]', space=sflag, size = 0x4, offset = 0, fixed_abs, tag = 'sflag constant byte address 0x0 - dummy sync flag']
  #allocation25 [shape = 's32[]', space=sflag, size = 0x4, offset = 0, fixed_abs, tag = 'sflag constant byte address 0x0 - dummy sync flag']
  #allocation26 [shape = 's32[]', space=sflag, size = 0x4, offset = 0, fixed_abs, tag = 'sflag constant byte address 0x0 - dummy sync flag']
  #allocation27 [shape = 's32[]', space=sflag, size = 0x4, offset = 0, fixed_abs, tag = 'sflag constant byte address 0x0 - dummy sync flag']
  #allocation28 [shape = 's32[]', space=sflag, size = 0x4, offset = 0, fixed_abs, tag = 'sflag constant byte address 0x0 - dummy sync flag']
  #allocation29 [shape = 's32[]', space=sflag, size = 0x4, offset = 0, fixed_abs, tag = 'sflag constant byte address 0x0 - dummy sync flag']
  #allocation30 [shape = 's32[]', space=sflag, size = 0x4, offset = 0, fixed_abs, tag = 'sflag constant byte address 0x0 - dummy sync flag']
  #allocation31 [shape = 's32[]', space=sflag, size = 0x4, offset = 0, fixed_abs, tag = 'sflag constant byte address 0x0 - dummy sync flag']
  #allocation32 [shape = 's32[]', space=sflag, size = 0x4, offset = 0, fixed_abs, tag = 'sflag constant byte address 0x0 - dummy sync flag']
  #allocation33 [shape = 's32[]', space=sflag, size = 0x4, offset = 0, fixed_abs, tag = 'sflag constant byte address 0x0 - dummy sync flag']
  #allocation34 [shape = 's32[]', space=sflag, size = 0x4, offset = 0, fixed_abs, tag = 'sflag constant byte address 0x0 - dummy sync flag']
  #allocation35 [shape = 's32[]', space=sflag, size = 0x4, offset = 0, fixed_abs, tag = 'sflag constant byte address 0x0 - dummy sync flag']
  #allocation36 [shape = 's32[]', space=sflag, size = 0x4, offset = 0, fixed_abs, tag = 'sflag constant byte address 0x0 - dummy sync flag']
  #allocation37 [shape = 's32[]', space=sflag, size = 0x4, offset = 0, fixed_abs, tag = 'sflag constant byte address 0x0 - dummy sync flag']
  #allocation38 [shape = 's32[]', space=sflag, size = 0x4, offset = 0, fixed_abs, tag = 'sflag constant byte address 0x0 - dummy sync flag']
  #allocation39 [shape = 's32[]', space=sflag, size = 0x4, offset = 0, fixed_abs, tag = 'sflag constant byte address 0x0 - dummy sync flag']
  #allocation40 [shape = 's32[]', space=sflag, size = 0x4, offset = 0, fixed_abs, tag = 'sflag constant byte address 0x0 - dummy sync flag']
  #allocation41 [shape = 's32[]', space=sflag, size = 0x4, offset = 0, fixed_abs, tag = 'sflag constant byte address 0x0 - dummy sync flag']
  #allocation42 [shape = 's32[]', space=sflag, size = 0x4, offset = 0, fixed_abs, tag = 'sflag constant byte address 0x0 - dummy sync flag']
  %s0 = inlined_call_operand.hbm [shape: s32[4,8], index: 0, kind: input, shape index: {}]
  %s1 = inlined_call_operand.hbm [shape: f32[1000,128], index: 1, kind: input, shape index: {}]
  %s2 = inlined_call_operand.hbm [shape: f32[8,128], index: 2, kind: input, shape index: {}]
  %s3 = inlined_call_operand.hbm [shape: f32[4,8,128], index: 3, kind: output, shape index: {}]
  %s4 = sld [smem:[#allocation0]]
  $region105: #{tpu_custom_call.1} parent=0
    _
  %s6 = ssub.s32 1, %s4
  %s7 = scalar_select 0, %s6, %s4
  %9 = dma.hbm_to_smem %s0, 64, [#allocation4], [#allocation3]
  %10 = dma.done [#allocation3], 64
  %11 = sfence
  $region1: #{tpu_custom_call.1} parent=0
    #allocation5 [shape = 'u8[4096]{0}', space=vmem, size = 0x1000, scoped, tag = 'input window, operand 2, single buffered']
    #allocation6 [shape = 's32[2]{0}', space=sflag, size = 0x8, scoped, tag = 'scoped memory for tpu_custom_call.1']
    #allocation7 [shape = 's32[2]{0}', space=sflag, size = 0x8, scoped, tag = 'scoped memory for tpu_custom_call.1']
    #allocation8 [shape = 'u8[16384]{0}', space=vmem, size = 0x4000, scoped, tag = 'output window, operand 0']
    %12 = vsyncpa [#allocation6], 0
    %13 = vsyncpa [#allocation7], 0
    %s14 = scalar_lea.sflag [#allocation7], 1
    %15 = vsyncpa %s14, 0
    loop: start=0, step=1, limit=4
    $region2: #{tpu_custom_call.1} parent=1 // loop_pre_header
      _
    $region3: #{tpu_custom_call.1} parent=1 // loop_header
      %s17 = sphi 0, %s21
      %p18 = scmp.ge.s32.totalorder %s17, 4
      %s25 = sphi 0, %s25
      %s27 = sphi 0, %s25
      %s28 = sphi 0, %s27
      %s42 = sphi 0, %s28
      %s48 = sphi 0, %s50
      %s51 = sphi 0, %s48
      %s52 = sphi 0, %s51
      %s68 = sphi 0, %s52
    $region4: #{tpu_custom_call.1} parent=1 // loop_header_branch
      %20 = sbr.rel (%p18) target = $region8
    $region5: #{tpu_custom_call.1} parent=1 // loop_body
      %s22 = ssub.s32 %s17, 1
      %s23 = ssub.s32 %s17, 2
      %s24 = sadd.s32 %s17, 1
      %s26 = sadd.s32 %s25, 1
      %p29 = scmp.eq.s32.totalorder %s17, 1
      %p30 = scmp.ne.s32.totalorder %s25, %s27
      %p31 = scmp.eq.s32.totalorder %s17, 0
      %p32 = por %p30, %p31
      %p33 = scmp.ne.s32.totalorder %s25, %s27
      %p34 = scmp.eq.s32.totalorder %s22, 1
      %p35 = por %p33, %p34
      %p36 = scmp.ne.s32.totalorder %s27, %s28
      %p37 = scmp.eq.s32.totalorder %s22, 0
      %p38 = por %p36, %p37
      %p39 = scmp.ne.s32.totalorder %s27, %s28
      %p40 = scmp.eq.s32.totalorder %s23, 1
      %p41 = por %p39, %p40
      %p43 = scmp.ne.s32.totalorder %s28, %s42
      %p44 = scmp.eq.s32.totalorder %s23, 0
      %p45 = por %p43, %p44
      %s46 = ssub.s32 %s17, %s24
      %p47 = scmp.eq.s32.totalorder %s46, 0
      %s49 = sadd.s32 %s48, 1
      %s50 = scalar_select %p47, %s48, %s49
      %p53 = pneg %p47
      %p54 = scmp.eq.s32.totalorder %s17, 1
      %p55 = por %p53, %p54
      %p56 = scmp.ne.s32.totalorder %s48, %s51
      %p57 = scmp.eq.s32.totalorder %s17, 0
      %p58 = por %p56, %p57
      %p59 = scmp.ne.s32.totalorder %s48, %s51
      %p60 = scmp.eq.s32.totalorder %s22, 1
      %p61 = por %p59, %p60
      %p62 = scmp.ne.s32.totalorder %s51, %s52
      %p63 = scmp.eq.s32.totalorder %s22, 0
      %p64 = por %p62, %p63
      %p65 = scmp.ne.s32.totalorder %s51, %s52
      %p66 = scmp.eq.s32.totalorder %s23, 1
      %p67 = por %p65, %p66
      %p69 = scmp.ne.s32.totalorder %s52, %s68
      %p70 = scmp.eq.s32.totalorder %s23, 0
      %p71 = por %p69, %p70
      %p72 = scmp.le.s32.totalorder 1, %s17
      %p73 = scmp.lt.s32.totalorder %s17, 3
      %p74 = pnand %p72, %p73
      %p75 = pneg %p74
      // Predicated region
      $region9: #{tpu_custom_call.1} parent=5 // pred_check
        _
      $region10: #{tpu_custom_call.1} parent=5 // pred_check_branch
        %77 = sbr.rel (%p74) target = $region12
      $region11: #{tpu_custom_call.1} parent=5 // pred_region
        %s78 = ssub.s32 %s17, 1
        // Predicated region
        $region13: #{tpu_custom_call.1} parent=11 // pred_check
          %p79 = pneg %p38
        $region14: #{tpu_custom_call.1} parent=11 // pred_check_branch
          %81 = sbr.rel (%p79) target = $region16
        $region15: #{tpu_custom_call.1} parent=11 // pred_region
          %s83 = ssub.s32 128, 128
          %84 = vsyncadd [#allocation6], %s83
          %s86 = sshll.u32 [#allocation5], 4
          %s87 = int_to_ptr.vmem [resolvable:$true] %s86
          %89 = dma.hbm_to_vmem [thread:$0]  %s2, 128, %s87, [#allocation6]
        $region16: #{tpu_custom_call.1} parent=11 // pred_fallthru
          _
      $region12: #{tpu_custom_call.1} parent=5 // pred_fallthru
        _
      %p90 = scmp.lt.s32.totalorder %s17, 2
      // Predicated region
      $region17: #{tpu_custom_call.1} parent=5 // pred_check
        %p91 = pneg %p90
      $region18: #{tpu_custom_call.1} parent=5 // pred_check_branch
        %93 = sbr.rel (%p91) target = $region20
      $region19: #{tpu_custom_call.1} parent=5 // pred_region
        _
      $region20: #{tpu_custom_call.1} parent=5 // pred_fallthru
        _
      %p94 = scmp.le.s32.totalorder 1, %s17
      %p95 = scmp.lt.s32.totalorder %s17, 3
      %p96 = pnand %p94, %p95
      %p97 = pneg %p96
      // Predicated region
      $region21: #{tpu_custom_call.1} parent=5 // pred_check
        _
      $region22: #{tpu_custom_call.1} parent=5 // pred_check_branch
        %99 = sbr.rel (%p96) target = $region24
      $region23: #{tpu_custom_call.1} parent=5 // pred_region
        %s100 = ssub.s32 %s17, 1
        // Predicated region
        $region25: #{tpu_custom_call.1} parent=23 // pred_check
          %p101 = pneg %p38
        $region26: #{tpu_custom_call.1} parent=23 // pred_check_branch
          %103 = sbr.rel (%p101) target = $region28
        $region27: #{tpu_custom_call.1} parent=23 // pred_region
          %104 = dma.done [#allocation6], 128
        $region28: #{tpu_custom_call.1} parent=23 // pred_fallthru
          _
        %p105 = pneg %p38
        %p106 = pneg %p35
        %p107 = pneg %p64
        %p108 = pneg %p61
        %s109 = sand.u32 %s51, 1
        %s110 = scalar_lea.sflag [#allocation7], %s109
        %s111 = sand.u32 %s51, 1
        %s112 = smul.addr %s111, 16
        %s113 = scalar_lea.vmem [#allocation8], %s112
        %s114 = smul.u32 2, %s22
        %s115 = smul.u32 %s22, 2
        %s116 = smul.u32 %s115, 128
        %s117 = sld [smem:[#allocation4 + %s116]]
        %s118 = smul.addr %s117, 16
        %s119 = scalar_lea.hbm %s1, %s118
        // Predicated region
        $region29: #{tpu_custom_call.1} parent=23 // pred_check
          _
        $region30: #{tpu_custom_call.1} parent=23 // pred_check_branch
          %121 = sbr.rel target = $region32
        $region31: #{tpu_custom_call.1} parent=23 // pred_region
          %122 = sst [smem:[#allocation11]] [#allocation10]
          %123 = sst [smem:[#allocation12]] [#allocation9]
        $region32: #{tpu_custom_call.1} parent=23 // pred_fallthru
          _
        %125 = shalt.err (0)
        %s127 = sshll.u32 %s113, 4
        %s128 = int_to_ptr.vmem [resolvable:$true] %s127
        %130 = dma.hbm_to_vmem [thread:$0]  %s119, 16, %s128, [#allocation2]
        %s131 = sadd.s32 %s116, 1
        %s132 = sld [smem:[#allocation4 + %s131]]
        %s133 = smul.addr %s132, 16
        %s134 = scalar_lea.hbm %s1, %s133
        %s135 = scalar_lea.vmem %s113, 1 [#allocation8]
        %s136 = scalar_lea.sflag [#allocation2], 1
        // Predicated region
        $region33: #{tpu_custom_call.1} parent=23 // pred_check
          _
        $region34: #{tpu_custom_call.1} parent=23 // pred_check_branch
          %138 = sbr.rel target = $region36
        $region35: #{tpu_custom_call.1} parent=23 // pred_region
          %139 = sst [smem:[#allocation11]] [#allocation14]
          %140 = sst [smem:[#allocation12]] [#allocation13]
        $region36: #{tpu_custom_call.1} parent=23 // pred_fallthru
          _
        %142 = shalt.err (0)
        %s144 = sshll.u32 %s135, 4
        %s145 = int_to_ptr.vmem [resolvable:$true] %s144
        %147 = dma.hbm_to_vmem [thread:$0]  %s134, 16, %s145, %s136
        %s148 = sadd.s32 %s116, 2
        %s149 = sld [smem:[#allocation4 + %s148]]
        %s150 = smul.addr %s149, 16
        %s151 = scalar_lea.hbm %s1, %s150
        %s152 = scalar_lea.vmem %s113, 2 [#allocation8]
        %s153 = scalar_lea.sflag [#allocation2], 2
        // Predicated region
        $region37: #{tpu_custom_call.1} parent=23 // pred_check
          _
        $region38: #{tpu_custom_call.1} parent=23 // pred_check_branch
          %155 = sbr.rel target = $region40
        $region39: #{tpu_custom_call.1} parent=23 // pred_region
          %156 = sst [smem:[#allocation11]] [#allocation16]
          %157 = sst [smem:[#allocation12]] [#allocation15]
        $region40: #{tpu_custom_call.1} parent=23 // pred_fallthru
          _
        %159 = shalt.err (0)
        %s161 = sshll.u32 %s152, 4
        %s162 = int_to_ptr.vmem [resolvable:$true] %s161
        %164 = dma.hbm_to_vmem [thread:$0]  %s151, 16, %s162, %s153
        %s165 = sadd.s32 %s116, 3
        %s166 = sld [smem:[#allocation4 + %s165]]
        %s167 = smul.addr %s166, 16
        %s168 = scalar_lea.hbm %s1, %s167
        %s169 = scalar_lea.vmem %s113, 3 [#allocation8]
        %s170 = scalar_lea.sflag [#allocation2], 3
        // Predicated region
        $region41: #{tpu_custom_call.1} parent=23 // pred_check
          _
        $region42: #{tpu_custom_call.1} parent=23 // pred_check_branch
          %172 = sbr.rel target = $region44
        $region43: #{tpu_custom_call.1} parent=23 // pred_region
          %173 = sst [smem:[#allocation11]] [#allocation18]
          %174 = sst [smem:[#allocation12]] [#allocation17]
        $region44: #{tpu_custom_call.1} parent=23 // pred_fallthru
          _
        %176 = shalt.err (0)
        %s178 = sshll.u32 %s169, 4
        %s179 = int_to_ptr.vmem [resolvable:$true] %s178
        %181 = dma.hbm_to_vmem [thread:$0]  %s168, 16, %s179, %s170
        %s182 = sadd.s32 %s116, 4
        %s183 = sld [smem:[#allocation4 + %s182]]
        %s184 = smul.addr %s183, 16
        %s185 = scalar_lea.hbm %s1, %s184
        %s186 = scalar_lea.vmem %s113, 4 [#allocation8]
        %s187 = scalar_lea.sflag [#allocation2], 4
        // Predicated region
        $region45: #{tpu_custom_call.1} parent=23 // pred_check
          _
        $region46: #{tpu_custom_call.1} parent=23 // pred_check_branch
          %189 = sbr.rel target = $region48
        $region47: #{tpu_custom_call.1} parent=23 // pred_region
          %190 = sst [smem:[#allocation11]] [#allocation20]
          %191 = sst [smem:[#allocation12]] [#allocation19]
        $region48: #{tpu_custom_call.1} parent=23 // pred_fallthru
          _
        %193 = shalt.err (0)
        %s195 = sshll.u32 %s186, 4
        %s196 = int_to_ptr.vmem [resolvable:$true] %s195
        %198 = dma.hbm_to_vmem [thread:$0]  %s185, 16, %s196, %s187
        %s199 = sadd.s32 %s116, 5
        %s200 = sld [smem:[#allocation4 + %s199]]
        %s201 = smul.addr %s200, 16
        %s202 = scalar_lea.hbm %s1, %s201
        %s203 = scalar_lea.vmem %s113, 5 [#allocation8]
        %s204 = scalar_lea.sflag [#allocation2], 5
        // Predicated region
        $region49: #{tpu_custom_call.1} parent=23 // pred_check
          _
        $region50: #{tpu_custom_call.1} parent=23 // pred_check_branch
          %206 = sbr.rel target = $region52
        $region51: #{tpu_custom_call.1} parent=23 // pred_region
          %207 = sst [smem:[#allocation11]] [#allocation22]
          %208 = sst [smem:[#allocation12]] [#allocation21]
        $region52: #{tpu_custom_call.1} parent=23 // pred_fallthru
          _
        %210 = shalt.err (0)
        %s212 = sshll.u32 %s203, 4
        %s213 = int_to_ptr.vmem [resolvable:$true] %s212
        %215 = dma.hbm_to_vmem [thread:$0]  %s202, 16, %s213, %s204
        %s216 = sadd.s32 %s116, 6
        %s217 = sld [smem:[#allocation4 + %s216]]
        %s218 = smul.addr %s217, 16
        %s219 = scalar_lea.hbm %s1, %s218
        %s220 = scalar_lea.vmem %s113, 6 [#allocation8]
        %s221 = scalar_lea.sflag [#allocation2], 6
        // Predicated region
        $region53: #{tpu_custom_call.1} parent=23 // pred_check
          _
        $region54: #{tpu_custom_call.1} parent=23 // pred_check_branch
          %223 = sbr.rel target = $region56
        $region55: #{tpu_custom_call.1} parent=23 // pred_region
          %224 = sst [smem:[#allocation11]] [#allocation24]
          %225 = sst [smem:[#allocation12]] [#allocation23]
        $region56: #{tpu_custom_call.1} parent=23 // pred_fallthru
          _
        %227 = shalt.err (0)
        %s229 = sshll.u32 %s220, 4
        %s230 = int_to_ptr.vmem [resolvable:$true] %s229
        %232 = dma.hbm_to_vmem [thread:$0]  %s219, 16, %s230, %s221
        %s233 = sadd.s32 %s116, 7
        %s234 = sld [smem:[#allocation4 + %s233]]
        %s235 = smul.addr %s234, 16
        %s236 = scalar_lea.hbm %s1, %s235
        %s237 = scalar_lea.vmem %s113, 7 [#allocation8]
        %s238 = scalar_lea.sflag [#allocation2], 7
        // Predicated region
        $region57: #{tpu_custom_call.1} parent=23 // pred_check
          _
        $region58: #{tpu_custom_call.1} parent=23 // pred_check_branch
          %240 = sbr.rel target = $region60
        $region59: #{tpu_custom_call.1} parent=23 // pred_region
          %241 = sst [smem:[#allocation11]] [#allocation26]
          %242 = sst [smem:[#allocation12]] [#allocation25]
        $region60: #{tpu_custom_call.1} parent=23 // pred_fallthru
          _
        %244 = shalt.err (0)
        %s246 = sshll.u32 %s237, 4
        %s247 = int_to_ptr.vmem [resolvable:$true] %s246
        %249 = dma.hbm_to_vmem [thread:$0]  %s236, 16, %s247, %s238
        %s250 = sadd.s32 %s115, 1
        %s251 = smul.u32 %s250, 128
        %s252 = sld [smem:[#allocation4 + %s251]]
        %s253 = smul.addr %s252, 16
        %s254 = scalar_lea.hbm %s1, %s253
        %s255 = scalar_lea.vmem %s113, 8 [#allocation8]
        %s256 = scalar_lea.sflag [#allocation2], 8
        // Predicated region
        $region61: #{tpu_custom_call.1} parent=23 // pred_check
          _
        $region62: #{tpu_custom_call.1} parent=23 // pred_check_branch
          %258 = sbr.rel target = $region64
        $region63: #{tpu_custom_call.1} parent=23 // pred_region
          %259 = sst [smem:[#allocation11]] [#allocation28]
          %260 = sst [smem:[#allocation12]] [#allocation27]
        $region64: #{tpu_custom_call.1} parent=23 // pred_fallthru
          _
        %262 = shalt.err (0)
        %s264 = sshll.u32 %s255, 4
        %s265 = int_to_ptr.vmem [resolvable:$true] %s264
        %267 = dma.hbm_to_vmem [thread:$0]  %s254, 16, %s265, %s256
        %s268 = sadd.s32 %s251, 1
        %s269 = sld [smem:[#allocation4 + %s268]]
        %s270 = smul.addr %s269, 16
        %s271 = scalar_lea.hbm %s1, %s270
        %s272 = scalar_lea.vmem %s113, 9 [#allocation8]
        %s273 = scalar_lea.sflag [#allocation2], 9
        // Predicated region
        $region65: #{tpu_custom_call.1} parent=23 // pred_check
          _
        $region66: #{tpu_custom_call.1} parent=23 // pred_check_branch
          %275 = sbr.rel target = $region68
        $region67: #{tpu_custom_call.1} parent=23 // pred_region
          %276 = sst [smem:[#allocation11]] [#allocation30]
          %277 = sst [smem:[#allocation12]] [#allocation29]
        $region68: #{tpu_custom_call.1} parent=23 // pred_fallthru
          _
        %279 = shalt.err (0)
        %s281 = sshll.u32 %s272, 4
        %s282 = int_to_ptr.vmem [resolvable:$true] %s281
        %284 = dma.hbm_to_vmem [thread:$0]  %s271, 16, %s282, %s273
        %s285 = sadd.s32 %s251, 2
        %s286 = sld [smem:[#allocation4 + %s285]]
        %s287 = smul.addr %s286, 16
        %s288 = scalar_lea.hbm %s1, %s287
        %s289 = scalar_lea.vmem %s113, 10 [#allocation8]
        %s290 = scalar_lea.sflag [#allocation2], 10
        // Predicated region
        $region69: #{tpu_custom_call.1} parent=23 // pred_check
          _
        $region70: #{tpu_custom_call.1} parent=23 // pred_check_branch
          %292 = sbr.rel target = $region72
        $region71: #{tpu_custom_call.1} parent=23 // pred_region
          %293 = sst [smem:[#allocation11]] [#allocation32]
          %294 = sst [smem:[#allocation12]] [#allocation31]
        $region72: #{tpu_custom_call.1} parent=23 // pred_fallthru
          _
        %296 = shalt.err (0)
        %s298 = sshll.u32 %s289, 4
        %s299 = int_to_ptr.vmem [resolvable:$true] %s298
        %301 = dma.hbm_to_vmem [thread:$0]  %s288, 16, %s299, %s290
        %s302 = sadd.s32 %s251, 3
        %s303 = sld [smem:[#allocation4 + %s302]]
        %s304 = smul.addr %s303, 16
        %s305 = scalar_lea.hbm %s1, %s304
        %s306 = scalar_lea.vmem %s113, 11 [#allocation8]
        %s307 = scalar_lea.sflag [#allocation2], 11
        // Predicated region
        $region73: #{tpu_custom_call.1} parent=23 // pred_check
          _
        $region74: #{tpu_custom_call.1} parent=23 // pred_check_branch
          %309 = sbr.rel target = $region76
        $region75: #{tpu_custom_call.1} parent=23 // pred_region
          %310 = sst [smem:[#allocation11]] [#allocation34]
          %311 = sst [smem:[#allocation12]] [#allocation33]
        $region76: #{tpu_custom_call.1} parent=23 // pred_fallthru
          _
        %313 = shalt.err (0)
        %s315 = sshll.u32 %s306, 4
        %s316 = int_to_ptr.vmem [resolvable:$true] %s315
        %318 = dma.hbm_to_vmem [thread:$0]  %s305, 16, %s316, %s307
        %s319 = sadd.s32 %s251, 4
        %s320 = sld [smem:[#allocation4 + %s319]]
        %s321 = smul.addr %s320, 16
        %s322 = scalar_lea.hbm %s1, %s321
        %s323 = scalar_lea.vmem %s113, 12 [#allocation8]
        %s324 = scalar_lea.sflag [#allocation2], 12
        // Predicated region
        $region77: #{tpu_custom_call.1} parent=23 // pred_check
          _
        $region78: #{tpu_custom_call.1} parent=23 // pred_check_branch
          %326 = sbr.rel target = $region80
        $region79: #{tpu_custom_call.1} parent=23 // pred_region
          %327 = sst [smem:[#allocation11]] [#allocation36]
          %328 = sst [smem:[#allocation12]] [#allocation35]
        $region80: #{tpu_custom_call.1} parent=23 // pred_fallthru
          _
        %330 = shalt.err (0)
        %s332 = sshll.u32 %s323, 4
        %s333 = int_to_ptr.vmem [resolvable:$true] %s332
        %335 = dma.hbm_to_vmem [thread:$0]  %s322, 16, %s333, %s324
        %s336 = sadd.s32 %s251, 5
        %s337 = sld [smem:[#allocation4 + %s336]]
        %s338 = smul.addr %s337, 16
        %s339 = scalar_lea.hbm %s1, %s338
        %s340 = scalar_lea.vmem %s113, 13 [#allocation8]
        %s341 = scalar_lea.sflag [#allocation2], 13
        // Predicated region
        $region81: #{tpu_custom_call.1} parent=23 // pred_check
          _
        $region82: #{tpu_custom_call.1} parent=23 // pred_check_branch
          %343 = sbr.rel target = $region84
        $region83: #{tpu_custom_call.1} parent=23 // pred_region
          %344 = sst [smem:[#allocation11]] [#allocation38]
          %345 = sst [smem:[#allocation12]] [#allocation37]
        $region84: #{tpu_custom_call.1} parent=23 // pred_fallthru
          _
        %347 = shalt.err (0)
        %s349 = sshll.u32 %s340, 4
        %s350 = int_to_ptr.vmem [resolvable:$true] %s349
        %352 = dma.hbm_to_vmem [thread:$0]  %s339, 16, %s350, %s341
        %s353 = sadd.s32 %s251, 6
        %s354 = sld [smem:[#allocation4 + %s353]]
        %s355 = smul.addr %s354, 16
        %s356 = scalar_lea.hbm %s1, %s355
        %s357 = scalar_lea.vmem %s113, 14 [#allocation8]
        %s358 = scalar_lea.sflag [#allocation2], 14
        // Predicated region
        $region85: #{tpu_custom_call.1} parent=23 // pred_check
          _
        $region86: #{tpu_custom_call.1} parent=23 // pred_check_branch
          %360 = sbr.rel target = $region88
        $region87: #{tpu_custom_call.1} parent=23 // pred_region
          %361 = sst [smem:[#allocation11]] [#allocation40]
          %362 = sst [smem:[#allocation12]] [#allocation39]
        $region88: #{tpu_custom_call.1} parent=23 // pred_fallthru
          _
        %364 = shalt.err (0)
        %s366 = sshll.u32 %s357, 4
        %s367 = int_to_ptr.vmem [resolvable:$true] %s366
        %369 = dma.hbm_to_vmem [thread:$0]  %s356, 16, %s367, %s358
        %s370 = sadd.s32 %s251, 7
        %s371 = sld [smem:[#allocation4 + %s370]]
        %s372 = smul.addr %s371, 16
        %s373 = scalar_lea.hbm %s1, %s372
        %s374 = scalar_lea.vmem %s113, 15 [#allocation8]
        %s375 = scalar_lea.sflag [#allocation2], 15
        // Predicated region
        $region89: #{tpu_custom_call.1} parent=23 // pred_check
          _
        $region90: #{tpu_custom_call.1} parent=23 // pred_check_branch
          %377 = sbr.rel target = $region92
        $region91: #{tpu_custom_call.1} parent=23 // pred_region
          %378 = sst [smem:[#allocation11]] [#allocation42]
          %379 = sst [smem:[#allocation12]] [#allocation41]
        $region92: #{tpu_custom_call.1} parent=23 // pred_fallthru
          _
        %381 = shalt.err (0)
        %s383 = sshll.u32 %s374, 4
        %s384 = int_to_ptr.vmem [resolvable:$true] %s383
        %386 = dma.hbm_to_vmem [thread:$0]  %s373, 16, %s384, %s375
        %s387 = smul.u32 1, 1
        %s388 = sshll.u32 %s387, 4
        %389 = dma.done [#allocation2], %s388
        %s390 = sshll.u32 %s387, 4
        %391 = dma.done %s136, %s390
        %s392 = sshll.u32 %s387, 4
        %393 = dma.done %s153, %s392
        %s394 = sshll.u32 %s387, 4
        %395 = dma.done %s170, %s394
        %s396 = sshll.u32 %s387, 4
        %397 = dma.done %s187, %s396
        %s398 = sshll.u32 %s387, 4
        %399 = dma.done %s204, %s398
        %s400 = sshll.u32 %s387, 4
        %401 = dma.done %s221, %s400
        %s402 = sshll.u32 %s387, 4
        %403 = dma.done %s238, %s402
        %s404 = sshll.u32 %s387, 4
        %405 = dma.done %s256, %s404
        %s406 = sshll.u32 %s387, 4
        %407 = dma.done %s273, %s406
        %s408 = sshll.u32 %s387, 4
        %409 = dma.done %s290, %s408
        %s410 = sshll.u32 %s387, 4
        %411 = dma.done %s307, %s410
        %s412 = sshll.u32 %s387, 4
        %413 = dma.done %s324, %s412
        %s414 = sshll.u32 %s387, 4
        %415 = dma.done %s341, %s414
        %s416 = sshll.u32 %s387, 4
        %417 = dma.done %s358, %s416
        %s418 = sshll.u32 %s387, 4
        %419 = dma.done %s375, %s418
        %v420 = vld [vmem:[%s113] sm:$0xff]
        %v421 = vld [vmem:[%s113 + $0x8] sm:$0xff]
        %v422 = vld [vmem:[#allocation5] sm:$0xff]
        %v423 = vadd.f32 %v420, %v422
        %v424 = vadd.f32 %v421, %v422
        %425 = vst [vmem:[%s113] sm:$0xff] %v423
        %426 = vst [vmem:[%s113 + $0x8] sm:$0xff] %v424
        %s427 = sand.u32 %s51, 1
        %s428 = scalar_lea.sflag [#allocation7], %s427
        %s429 = sand.u32 %s51, 1
        %s430 = smul.addr %s429, 16
        %s431 = scalar_lea.vmem [#allocation8], %s430
        // Predicated region
        $region93: #{tpu_custom_call.1} parent=23 // pred_check
          %p432 = pneg %p61
        $region94: #{tpu_custom_call.1} parent=23 // pred_check_branch
          %434 = sbr.rel (%p432) target = $region96
        $region95: #{tpu_custom_call.1} parent=23 // pred_region
          %s435 = smul.u32 2, %s22
          %s437 = ssub.s32 256, 256
          %438 = vsyncadd %s428, %s437
          %s439 = smul.addr %s435, 128
          %s440 = scalar_lea.hbm %s3, %s439
          %s441 = sshll.u32 %s431, 4
          %s442 = int_to_ptr.vmem [resolvable:$true] %s441
          %447 = dma.vmem_to_hbm [thread:$0]  %s442, 256, %s440, %s428, 128, 128, 8
        $region96: #{tpu_custom_call.1} parent=23 // pred_fallthru
          _
      $region24: #{tpu_custom_call.1} parent=5 // pred_fallthru
        _
      %p448 = scmp.le.s32.totalorder 2, %s17
      // Predicated region
      $region97: #{tpu_custom_call.1} parent=5 // pred_check
        %p449 = pneg %p448
      $region98: #{tpu_custom_call.1} parent=5 // pred_check_branch
        %451 = sbr.rel (%p449) target = $region100
      $region99: #{tpu_custom_call.1} parent=5 // pred_region
        %s452 = ssub.s32 %s17, 2
        // Predicated region
        $region101: #{tpu_custom_call.1} parent=99 // pred_check
          %p453 = pneg %p67
        $region102: #{tpu_custom_call.1} parent=99 // pred_check_branch
          %455 = sbr.rel (%p453) target = $region104
        $region103: #{tpu_custom_call.1} parent=99 // pred_region
          %s456 = sand.u32 %s52, 1
          %s457 = scalar_lea.sflag [#allocation7], %s456
          %s458 = sand.u32 %s52, 1
          %s459 = smul.addr %s458, 16
          %s460 = scalar_lea.vmem [#allocation8], %s459
          %461 = dma.done %s457, 256
        $region104: #{tpu_custom_call.1} parent=99 // pred_fallthru
          _
      $region100: #{tpu_custom_call.1} parent=5 // pred_fallthru
        _
    $region6: #{tpu_custom_call.1} parent=1 // loop_footer
      %s21 = sadd.s32 1, %s17
    $region7: #{tpu_custom_call.1} parent=1 // loop_footer_branch
      %16 = sbr.rel target = $region3
    $region8: #{tpu_custom_call.1} parent=1 // loop_exit
      _
    %462 = vsyncpa [#allocation6], 1
    %s463 = scalar_lea.sflag [#allocation6], 1
    %464 = vsyncpa %s463, 1
    %465 = vsyncpa [#allocation7], 1
    %s466 = scalar_lea.sflag [#allocation7], 1
    %467 = vsyncpa %s466, 1
  %468 = vsyncmov [#allocation2]
  %s469 = vpop.sfrf %468
  %p470 = scmp.eq.s32.totalorder %s469, 0
  %p471 = pneg %p470
  %473 = shalt.err (%p471)
  %s474 = scalar_lea.sflag [#allocation2], 1
  %475 = vsyncmov %s474
  %s476 = vpop.sfrf %475
  %p477 = scmp.eq.s32.totalorder %s476, 0
  %p478 = pneg %p477
  %480 = shalt.err (%p478)
  %s481 = scalar_lea.sflag [#allocation2], 2
  %482 = vsyncmov %s481
  %s483 = vpop.sfrf %482
  %p484 = scmp.eq.s32.totalorder %s483, 0
  %p485 = pneg %p484
  %487 = shalt.err (%p485)
  %s488 = scalar_lea.sflag [#allocation2], 3
  %489 = vsyncmov %s488
  %s490 = vpop.sfrf %489
  %p491 = scmp.eq.s32.totalorder %s490, 0
  %p492 = pneg %p491
  %494 = shalt.err (%p492)
  %s495 = scalar_lea.sflag [#allocation2], 4
  %496 = vsyncmov %s495
  %s497 = vpop.sfrf %496
  %p498 = scmp.eq.s32.totalorder %s497, 0
  %p499 = pneg %p498
  %501 = shalt.err (%p499)
  %s502 = scalar_lea.sflag [#allocation2], 5
  %503 = vsyncmov %s502
  %s504 = vpop.sfrf %503
  %p505 = scmp.eq.s32.totalorder %s504, 0
  %p506 = pneg %p505
  %508 = shalt.err (%p506)
  %s509 = scalar_lea.sflag [#allocation2], 6
  %510 = vsyncmov %s509
  %s511 = vpop.sfrf %510
  %p512 = scmp.eq.s32.totalorder %s511, 0
  %p513 = pneg %p512
  %515 = shalt.err (%p513)
  %s516 = scalar_lea.sflag [#allocation2], 7
  %517 = vsyncmov %s516
  %s518 = vpop.sfrf %517
  %p519 = scmp.eq.s32.totalorder %s518, 0
  %p520 = pneg %p519
  %522 = shalt.err (%p520)
  %s523 = scalar_lea.sflag [#allocation2], 8
  %524 = vsyncmov %s523
  %s525 = vpop.sfrf %524
  %p526 = scmp.eq.s32.totalorder %s525, 0
  %p527 = pneg %p526
  %529 = shalt.err (%p527)
  %s530 = scalar_lea.sflag [#allocation2], 9
  %531 = vsyncmov %s530
  %s532 = vpop.sfrf %531
  %p533 = scmp.eq.s32.totalorder %s532, 0
  %p534 = pneg %p533
  %536 = shalt.err (%p534)
  %s537 = scalar_lea.sflag [#allocation2], 10
  %538 = vsyncmov %s537
  %s539 = vpop.sfrf %538
  %p540 = scmp.eq.s32.totalorder %s539, 0
  %p541 = pneg %p540
  %543 = shalt.err (%p541)
  %s544 = scalar_lea.sflag [#allocation2], 11
  %545 = vsyncmov %s544
  %s546 = vpop.sfrf %545
  %p547 = scmp.eq.s32.totalorder %s546, 0
  %p548 = pneg %p547
  %550 = shalt.err (%p548)
  %s551 = scalar_lea.sflag [#allocation2], 12
  %552 = vsyncmov %s551
  %s553 = vpop.sfrf %552
  %p554 = scmp.eq.s32.totalorder %s553, 0
  %p555 = pneg %p554
  %557 = shalt.err (%p555)
  %s558 = scalar_lea.sflag [#allocation2], 13
  %559 = vsyncmov %s558
  %s560 = vpop.sfrf %559
  %p561 = scmp.eq.s32.totalorder %s560, 0
  %p562 = pneg %p561
  %564 = shalt.err (%p562)
  %s565 = scalar_lea.sflag [#allocation2], 14
  %566 = vsyncmov %s565
  %s567 = vpop.sfrf %566
  %p568 = scmp.eq.s32.totalorder %s567, 0
  %p569 = pneg %p568
  %571 = shalt.err (%p569)
  %s572 = scalar_lea.sflag [#allocation2], 15
  %573 = vsyncmov %s572
  %s574 = vpop.sfrf %573
  %p575 = scmp.eq.s32.totalorder %s574, 0
  %p576 = pneg %p575
  %578 = shalt.err (%p576)

</llo_original>
